<compile_context>
chip_gen: v7x
topology: tpu7x:2x2x1
jax: 0.10.0
libtpu: 0.0.40
codegen_flags: <defaults>
</compile_context>

<pallas_src>
import functools

import jax
import jax.numpy as jnp
from jax.experimental import pallas as pl
from jax.experimental.pallas import tpu as pltpu

EPS = 1e-5
_LANE = 128
_VMEM_LIMIT_BYTES = 48 * 1024 * 1024  # > 32 MiB scoped default, < v7x 64 MiB physical


def _round_up(x, m):
    return (x + m - 1) // m * m


# --------------------------------------------------------------------------- #
# Kernel 1: conv as a single merged-K matmul per M tile + per-tile BN partial  #
# statistics (sum, sum of squares) taken from the f32 accumulator.             #
# Grid = (num_m_tiles,): no reduction axis, no accumulator carry.              #
# --------------------------------------------------------------------------- #
def _conv_stats_kernel(taps_ref, w_ref, y_ref, stats_ref):
    # (TILE_M, K) @ (K, Cout_pad): bf16 operands, f32 accumulation on the MXU.
    acc = jnp.dot(taps_ref[...], w_ref[...], preferred_element_type=jnp.float32)
    # Emit bf16 (halves HBM traffic of the intermediate); stats use the f32 acc.
    y_ref[...] = acc.astype(y_ref.dtype)
    stats_ref[0, :] = jnp.sum(acc, axis=0)        # per-tile sum
    stats_ref[1, :] = jnp.sum(acc * acc, axis=0)  # per-tile sum of squares


def _finalize_stats(stats, m_true, tile_m):
    """Combine per-tile (sum, sumsq) partials Welford-style in f32.

    Padded rows of the last tile contribute exact zeros to the partial sums, so
    using the *true* per-tile counts keeps mean/var exact.
    """
    num_m = stats.shape[0]
    counts = jnp.clip(m_true - tile_m * jnp.arange(num_m), 1, tile_m).astype(jnp.float32)
    sums = stats[:, 0, :]                           # (num_m, cp)
    sqs = stats[:, 1, :]                            # (num_m, cp)
    mean_i = sums / counts[:, None]
    m2_i = sqs - sums * mean_i                      # per-tile sum of squared deviations
    mean = jnp.sum(sums, axis=0) / m_true
    var = (jnp.sum(m2_i, axis=0)
           + jnp.sum(counts[:, None] * (mean_i - mean) ** 2, axis=0)) / m_true
    return mean, jnp.maximum(var, 0.0)


def conv_bn_stats(taps, w, m_true, tile_m):
    """taps: (M_pad, K) bf16 im2col rows; w: (K, Cout_pad) bf16.

    Returns (conv_out bf16 (M_pad, Cout_pad), mean (Cout_pad,) f32, var (Cout_pad,) f32).
    """
    m_pad, K = taps.shape
    cp = w.shape[1]
    num_m = m_pad // tile_m

    cost = pl.CostEstimate(
        flops=2 * m_pad * K * cp,
        transcendentals=0,
        bytes_accessed=(taps.size * 2 + w.size * 2 + m_pad * cp * 2 + num_m * 2 * cp * 4),
    )

    y, stats = pl.pallas_call(
        _conv_stats_kernel,
        grid=(num_m,),
        in_specs=[
            pl.BlockSpec((tile_m, K), lambda m: (m, 0)),   # streaming activation rows
            pl.BlockSpec((K, cp), lambda m: (0, 0)),        # weights stay VMEM-resident
        ],
        out_specs=(
            pl.BlockSpec((tile_m, cp), lambda m: (m, 0)),   # bf16 conv output
            pl.BlockSpec((None, 2, cp), lambda m: (m, 0, 0)),
        ),
        out_shape=(
            jax.ShapeDtypeStruct((m_pad, cp), jnp.bfloat16),
            jax.ShapeDtypeStruct((num_m, 2, cp), jnp.float32),
        ),
        compiler_params=pltpu.CompilerParams(
            dimension_semantics=("parallel",),   # M tiles shard across v7x megacore
            vmem_limit_bytes=_VMEM_LIMIT_BYTES,
        ),
        cost_estimate=cost,
    )(taps, w)

    mean, var = _finalize_stats(stats, m_true, tile_m)
    return y, mean, var


# --------------------------------------------------------------------------- #
# Kernel 2: y*scale + shift  [+ residual (optionally with its own BN affine)]  #
# [+ ReLU].  Only used for the final bn2 + shortcut + relu epilogue.           #
# --------------------------------------------------------------------------- #
def _bn_apply_kernel(*refs, apply_relu, has_residual, residual_affine):
    if has_residual:
        if residual_affine:
            y_ref, scale_ref, shift_ref, r_ref, rs_ref, rb_ref, o_ref = refs
        else:
            y_ref, scale_ref, shift_ref, r_ref, o_ref = refs
    else:
        y_ref, scale_ref, shift_ref, o_ref = refs

    out = y_ref[...].astype(jnp.float32) * scale_ref[...] + shift_ref[...]
    if has_residual:
        r = r_ref[...].astype(jnp.float32)
        if residual_affine:
            r = r * rs_ref[...] + rb_ref[...]
        out = out + r
    if apply_relu:
        out = jnp.maximum(out, 0.0)
    o_ref[...] = out.astype(o_ref.dtype)


def bn_apply(y, scale, shift, *, residual=None, apply_relu, tile_m, out_dtype):
    m_pad, cp = y.shape
    num_m = m_pad // tile_m

    row_spec = pl.BlockSpec((tile_m, cp), lambda m: (m, 0))
    vec_spec = pl.BlockSpec((1, cp), lambda m: (0, 0))    # resident across the grid

    inputs = [y, scale.reshape(1, cp), shift.reshape(1, cp)]
    in_specs = [row_spec, vec_spec, vec_spec]
    residual_affine = False
    if residual is not None:
        ry, rscale, rshift = residual
        inputs.append(ry)
        in_specs.append(pl.BlockSpec((tile_m, cp), lambda m: (m, 0)))
        if rscale is not None:                             # shortcut conv + BN branch
            residual_affine = True
            inputs += [rscale.reshape(1, cp), rshift.reshape(1, cp)]
            in_specs += [vec_spec, vec_spec]

    kernel = functools.partial(_bn_apply_kernel, apply_relu=apply_relu,
                               has_residual=residual is not None,
                               residual_affine=residual_affine)
    return pl.pallas_call(
        kernel,
        grid=(num_m,),
        in_specs=in_specs,
        out_specs=row_spec,
        out_shape=jax.ShapeDtypeStruct((m_pad, cp), out_dtype),
        compiler_params=pltpu.CompilerParams(
            dimension_semantics=("parallel",),
            vmem_limit_bytes=_VMEM_LIMIT_BYTES,
        ),
    )(*inputs)


# ------------------------------- JAX glue ---------------------------------- #
def _im2col(x_nhwc, ksize, stride, padding):
    """Merged-K im2col: (N*OH*OW, ksize*ksize*Cin), tap order (kh, kw, cin)."""
    N, H, W, C = x_nhwc.shape
    OH = (H + 2 * padding - ksize) // stride + 1
    OW = (W + 2 * padding - ksize) // stride + 1
    xp = jnp.pad(x_nhwc, ((0, 0), (padding, padding), (padding, padding), (0, 0)))
    cols = []
    for kh in range(ksize):
        for kw in range(ksize):
            sl = xp[:, kh:kh + OH * stride:stride, kw:kw + OW * stride:stride, :]
            cols.append(sl.reshape(N * OH * OW, C))
    return jnp.concatenate(cols, axis=-1)


def _pad_rows(taps, m_pad):
    m = taps.shape[0]
    if m == m_pad:
        return taps
    return jnp.pad(taps, ((0, m_pad - m), (0, 0)))


def _w_mat(w_oihw, cout_pad):
    """PyTorch (Cout, Cin, KH, KW) -> (KH*KW*Cin, cout_pad) bf16.

    Contraction dim is NOT zero-padded (only the lane/store dim is)."""
    Cout, Cin, KH, KW = w_oihw.shape
    w = jnp.transpose(w_oihw, (2, 3, 1, 0)).reshape(KH * KW * Cin, Cout)
    w = jnp.pad(w, ((0, 0), (0, cout_pad - Cout)))
    return w.astype(jnp.bfloat16)


def _bn_affine(gamma, beta, mean, var, cout_pad):
    c = gamma.shape[0]
    g = jnp.pad(gamma.astype(jnp.float32), (0, cout_pad - c))
    b = jnp.pad(beta.astype(jnp.float32), (0, cout_pad - c))
    scale = g * jax.lax.rsqrt(var + EPS)
    shift = b - mean * scale
    return scale, shift


def basic_block_super_forward_nhwc(x_nhwc, params, stride, tile_m=1024):
    """BasicBlockSuper forward (ConvF == nn.Conv2d path), training-mode BN, NHWC."""
    N, H, W, in_planes = x_nhwc.shape
    planes = params["w1"].shape[0]
    cp = _round_up(planes, _LANE)                       # lane-dense output channels

    OH = (H + 2 - 3) // stride + 1
    OW = (W + 2 - 3) // stride + 1
    M = N * OH * OW
    tm = min(_round_up(tile_m, 16), _round_up(M, 16))   # 16-row bf16 sublane packing
    m_pad = _round_up(M, tm)

    x_bf16 = x_nhwc.astype(jnp.bfloat16)

    # ---- conv1 (3x3, stride, pad 1) + bn1 batch stats ----
    taps1 = _im2col(x_bf16, 3, stride, 1)               # (M, 9*in_planes)
    y1, mean1, var1 = conv_bn_stats(_pad_rows(taps1, m_pad),
                                    _w_mat(params["w1"], cp), M, tm)
    scale1, shift1 = _bn_affine(params["g1"], params["b1"], mean1, var1, cp)

    # BN1 affine + ReLU as cheap element-wise work that XLA fuses into the conv2
    # im2col construction (no standalone (M, cp) kernel pass / round trip).
    out1 = jax.nn.relu(y1[:M, :planes].astype(jnp.float32) * scale1[:planes]
                       + shift1[:planes]).astype(jnp.bfloat16)
    out1_nhwc = out1.reshape(N, OH, OW, planes)

    # ---- shortcut ----
    if stride != 1 or in_planes != planes:
        taps_s = _im2col(x_bf16, 1, stride, 0)           # (M, in_planes)
        ys, mean_s, var_s = conv_bn_stats(_pad_rows(taps_s, m_pad),
                                          _w_mat(params["ws"], cp), M, tm)
        rscale, rshift = _bn_affine(params["gs"], params["bs"], mean_s, var_s, cp)
        residual = (ys, rscale, rshift)                  # BN affine fused in pass 2
    else:
        # Identity shortcut carried in bf16 (half the bytes of the old f32 copy).
        res = jnp.pad(x_bf16.reshape(M, in_planes),
                      ((0, m_pad - M), (0, cp - in_planes)))
        residual = (res, None, None)                     # affine skipped in-kernel

    # ---- conv2 (3x3, stride 1, pad 1) + bn2 + shortcut + relu ----
    taps2 = _im2col(out1_nhwc, 3, 1, 1)                  # (M, 9*planes), true K
    y2, mean2, var2 = conv_bn_stats(_pad_rows(taps2, m_pad),
                                    _w_mat(params["w2"], cp), M, tm)
    scale2, shift2 = _bn_affine(params["g2"], params["b2"], mean2, var2, cp)
    out = bn_apply(y2, scale2, shift2, residual=residual, apply_relu=True,
                   tile_m=tm, out_dtype=jnp.float32)

    return out[:M, :planes].reshape(N, OH, OW, planes)


def basic_block_super_forward(x_nchw, params, stride, tile_m=1024):
    """Thin NCHW wrapper (PyTorch layout parity). Chain blocks via the NHWC core."""
    x = jnp.transpose(x_nchw, (0, 2, 3, 1)).astype(jnp.float32)
    out = basic_block_super_forward_nhwc(x, params, stride, tile_m=tile_m)
    return jnp.transpose(out, (0, 3, 1, 2))


# -------------------------- pure-JAX reference ------------------------------ #
def _reference_forward(x, params, stride):
    in_planes = x.shape[1]
    planes = params["w1"].shape[0]

    def conv(x, w, s, p):
        return jax.lax.conv_general_dilated(
            x, w, (s, s), [(p, p), (p, p)],
            dimension_numbers=("NCHW", "OIHW", "NCHW"))

    def bn(x, g, b):
        mean = x.mean(axis=(0, 2, 3), keepdims=True)
        var = ((x - mean) ** 2).mean(axis=(0, 2, 3), keepdims=True)
        return (x - mean) * jax.lax.rsqrt(var + EPS) * g.reshape(1, -1, 1, 1) \
            + b.reshape(1, -1, 1, 1)

    out = jax.nn.relu(bn(conv(x, params["w1"], stride, 1), params["g1"], params["b1"]))
    out = bn(conv(out, params["w2"], 1, 1), params["g2"], params["b2"])
    if stride != 1 or in_planes != planes:
        sc = bn(conv(x, params["ws"], stride, 0), params["gs"], params["bs"])
    else:
        sc = x
    return jax.nn.relu(out + sc)


# ---------------------------------- main ------------------------------------ #
def _make_params(key, in_planes, planes, with_shortcut):
    ks = jax.random.split(key, 9)
    p = {
        "w1": 0.1 * jax.random.normal(ks[0], (planes, in_planes, 3, 3), jnp.float32),
        "g1": 1.0 + 0.1 * jax.random.normal(ks[1], (planes,), jnp.float32),
        "b1": 0.1 * jax.random.normal(ks[2], (planes,), jnp.float32),
        "w2": 0.1 * jax.random.normal(ks[3], (planes, planes, 3, 3), jnp.float32),
        "g2": 1.0 + 0.1 * jax.random.normal(ks[4], (planes,), jnp.float32),
        "b2": 0.1 * jax.random.normal(ks[5], (planes,), jnp.float32),
    }
    if with_shortcut:
        p["ws"] = 0.1 * jax.random.normal(ks[6], (planes, in_planes, 1, 1), jnp.float32)
        p["gs"] = 1.0 + 0.1 * jax.random.normal(ks[7], (planes,), jnp.float32)
        p["bs"] = 0.1 * jax.random.normal(ks[8], (planes,), jnp.float32)
    return p


if __name__ == "__main__":
    key = jax.random.PRNGKey(0)
    k_params, k_x = jax.random.split(key)

    # ---- Test 1: stride=2, in_planes != planes -> 1x1-conv + BN shortcut branch.
    # tile_m=64 with M = 2*8*8 = 128 -> 2 M tiles (exercises the tiled two-pass BN).
    N, in_planes, planes, H, W, stride = 2, 4, 8, 16, 16, 2
    params = _make_params(k_params, in_planes, planes, with_shortcut=True)
    x = jax.random.normal(k_x, (N, in_planes, H, W), jnp.float32)

    fwd = jax.jit(functools.partial(basic_block_super_forward, stride=stride, tile_m=64))
    out = jax.block_until_ready(fwd(x, params))
    ref = jax.block_until_ready(_reference_forward(x, params, stride))
    assert out.shape == (N, planes, H // stride, W // stride), out.shape
    err1 = float(jnp.max(jnp.abs(out - ref)))
    # bf16 matmul operands + bf16 intermediates vs f32 reference -> loosened tolerance.
    assert jnp.allclose(out, ref, atol=7.5e-2, rtol=5e-2), err1

    # ---- Test 2: stride=1, in_planes == planes -> identity (bf16) shortcut branch.
    # M = 2*16*16 = 512, tile_m=128 -> 4 M tiles.
    N2, planes2, H2, W2, stride2 = 2, 8, 16, 16, 1
    params2 = _make_params(jax.random.fold_in(k_params, 1), planes2, planes2,
                           with_shortcut=False)
    x2 = jax.random.normal(jax.random.fold_in(k_x, 1), (N2, planes2, H2, W2), jnp.float32)

    fwd2 = jax.jit(functools.partial(basic_block_super_forward, stride=stride2, tile_m=128))
    out2 = jax.block_until_ready(fwd2(x2, params2))
    ref2 = jax.block_until_ready(_reference_forward(x2, params2, stride2))
    assert out2.shape == (N2, planes2, H2, W2), out2.shape
    err2 = float(jnp.max(jnp.abs(out2 - ref2)))
    assert jnp.allclose(out2, ref2, atol=7.5e-2, rtol=5e-2), err2

    print("KERNEL_OK")
</pallas_src>

<mosaic_0001>
module attributes {stable_mosaic.version = 11 : i64} {
  func.func @_conv_stats_kernel(%arg0: i32, %arg1: memref<64x36xbf16, #tpu.memory_space<vmem>>, %arg2: memref<36x128xbf16, #tpu.memory_space<vmem>>, %arg3: memref<64x128xbf16, #tpu.memory_space<vmem>>, %arg4: memref<1x2x128xf32, #tpu.memory_space<vmem>>) attributes {dimension_semantics = [#tpu.dimension_semantics<parallel>], iteration_bounds = array<i64: 2>, scalar_prefetch = 0 : i64, scratch_operands = 0 : i64, tpu.core_type = #tpu.core_type<tc>, window_params = [{transform_indices = @transform_0, window_bounds = array<i64: 64, 36>}, {pipeline_mode = #tpu.pipeline_mode<synchronous>, transform_indices = @transform_1, window_bounds = array<i64: 36, 128>}, {transform_indices = @transform_2, window_bounds = array<i64: 64, 128>}, {transform_indices = @transform_3, window_bounds = array<i64: 1, 2, 128>}]} {
    %c0 = arith.constant 0 : index
    %c0_0 = arith.constant 0 : index
    %0 = vector.load %arg1[%c0, %c0_0] : memref<64x36xbf16, #tpu.memory_space<vmem>>, vector<64x36xbf16>
    %c0_1 = arith.constant 0 : index
    %c0_2 = arith.constant 0 : index
    %1 = vector.load %arg2[%c0_1, %c0_2] : memref<36x128xbf16, #tpu.memory_space<vmem>>, vector<36x128xbf16>
    %cst = arith.constant dense<0.000000e+00> : vector<64x128xf32>
    %2 = tpu.matmul %0, %1, %cst {dimension_numbers = #tpu.dot_dimension_numbers<[1], [0], [0], [1], [0, 0, 1, 1], [], []>} : vector<64x36xbf16>, vector<36x128xbf16>, vector<64x128xf32> -> vector<64x128xf32>
    %3 = arith.truncf %2 : vector<64x128xf32> to vector<64x128xbf16>
    %c0_3 = arith.constant 0 : index
    %c0_4 = arith.constant 0 : index
    %4 = vector.load %arg3[%c0_3, %c0_4] : memref<64x128xbf16, #tpu.memory_space<vmem>>, vector<64x128xbf16>
    tpu.vector_store %arg3[%c0_3, %c0_4], %3 {strides = array<i32>} : memref<64x128xbf16, #tpu.memory_space<vmem>>, vector<64x128xbf16>,
    %cst_5 = arith.constant dense<0.000000e+00> : vector<128xf32>
    %5 = vector.multi_reduction <add>, %2, %cst_5 [0] : vector<64x128xf32> to vector<128xf32>
    %c0_6 = arith.constant 0 : index
    %c0_7 = arith.constant 0 : index
    %c0_8 = arith.constant 0 : index
    %6 = vector.load %arg4[%c0_6, %c0_7, %c0_8] : memref<1x2x128xf32, #tpu.memory_space<vmem>>, vector<1x1x128xf32>
    %7 = vector.shape_cast %6 : vector<1x1x128xf32> to vector<128xf32>
    %8 = vector.shape_cast %5 : vector<128xf32> to vector<1x1x128xf32>
    tpu.vector_store %arg4[%c0_6, %c0_7, %c0_8], %8 {strides = array<i32>} : memref<1x2x128xf32, #tpu.memory_space<vmem>>, vector<1x1x128xf32>,
    %9 = arith.mulf %2, %2 : vector<64x128xf32>
    %cst_9 = arith.constant dense<0.000000e+00> : vector<128xf32>
    %10 = vector.multi_reduction <add>, %9, %cst_9 [0] : vector<64x128xf32> to vector<128xf32>
    %c0_10 = arith.constant 0 : index
    %c1 = arith.constant 1 : index
    %c0_11 = arith.constant 0 : index
    %11 = vector.load %arg4[%c0_10, %c1, %c0_11] : memref<1x2x128xf32, #tpu.memory_space<vmem>>, vector<1x1x128xf32>
    %12 = vector.shape_cast %11 : vector<1x1x128xf32> to vector<128xf32>
    %13 = vector.shape_cast %10 : vector<128xf32> to vector<1x1x128xf32>
    tpu.vector_store %arg4[%c0_10, %c1, %c0_11], %13 {strides = array<i32>} : memref<1x2x128xf32, #tpu.memory_space<vmem>>, vector<1x1x128xf32>,
    return
  }
  func.func @transform_0(%arg0: i32) -> (i32, i32) {
    %c0_i32 = arith.constant 0 : i32
    %c0_i32_0 = arith.constant 0 : i32
    return %arg0, %c0_i32 : i32, i32
  }
  func.func @transform_1(%arg0: i32) -> (i32, i32) {
    %c0_i32 = arith.constant 0 : i32
    %c0_i32_0 = arith.constant 0 : i32
    %c0_i32_1 = arith.constant 0 : i32
    return %c0_i32, %c0_i32_0 : i32, i32
  }
  func.func @transform_2(%arg0: i32) -> (i32, i32) {
    %c0_i32 = arith.constant 0 : i32
    %c0_i32_0 = arith.constant 0 : i32
    return %arg0, %c0_i32 : i32, i32
  }
  func.func @transform_3(%arg0: i32) -> (i32, i32, i32) {
    %c0_i32 = arith.constant 0 : i32
    %c0_i32_0 = arith.constant 0 : i32
    %c0_i32_1 = arith.constant 0 : i32
    return %arg0, %c0_i32, %c0_i32_0 : i32, i32, i32
  }
}

module attributes {stable_mosaic.version = 11 : i64} {
  func.func @_conv_stats_kernel(%arg0: i32, %arg1: memref<64x4xbf16, #tpu.memory_space<vmem>>, %arg2: memref<4x128xbf16, #tpu.memory_space<vmem>>, %arg3: memref<64x128xbf16, #tpu.memory_space<vmem>>, %arg4: memref<1x2x128xf32, #tpu.memory_space<vmem>>) attributes {dimension_semantics = [#tpu.dimension_semantics<parallel>], iteration_bounds = array<i64: 2>, scalar_prefetch = 0 : i64, scratch_operands = 0 : i64, tpu.core_type = #tpu.core_type<tc>, window_params = [{transform_indices = @transform_0, window_bounds = array<i64: 64, 4>}, {pipeline_mode = #tpu.pipeline_mode<synchronous>, transform_indices = @transform_1, window_bounds = array<i64: 4, 128>}, {transform_indices = @transform_2, window_bounds = array<i64: 64, 128>}, {transform_indices = @transform_3, window_bounds = array<i64: 1, 2, 128>}]} {
    %c0 = arith.constant 0 : index
    %c0_0 = arith.constant 0 : index
    %0 = vector.load %arg1[%c0, %c0_0] : memref<64x4xbf16, #tpu.memory_space<vmem>>, vector<64x4xbf16>
    %c0_1 = arith.constant 0 : index
    %c0_2 = arith.constant 0 : index
    %1 = vector.load %arg2[%c0_1, %c0_2] : memref<4x128xbf16, #tpu.memory_space<vmem>>, vector<4x128xbf16>
    %cst = arith.constant dense<0.000000e+00> : vector<64x128xf32>
    %2 = tpu.matmul %0, %1, %cst {dimension_numbers = #tpu.dot_dimension_numbers<[1], [0], [0], [1], [0, 0, 1, 1], [], []>} : vector<64x4xbf16>, vector<4x128xbf16>, vector<64x128xf32> -> vector<64x128xf32>
    %3 = arith.truncf %2 : vector<64x128xf32> to vector<64x128xbf16>
    %c0_3 = arith.constant 0 : index
    %c0_4 = arith.constant 0 : index
    %4 = vector.load %arg3[%c0_3, %c0_4] : memref<64x128xbf16, #tpu.memory_space<vmem>>, vector<64x128xbf16>
    tpu.vector_store %arg3[%c0_3, %c0_4], %3 {strides = array<i32>} : memref<64x128xbf16, #tpu.memory_space<vmem>>, vector<64x128xbf16>,
    %cst_5 = arith.constant dense<0.000000e+00> : vector<128xf32>
    %5 = vector.multi_reduction <add>, %2, %cst_5 [0] : vector<64x128xf32> to vector<128xf32>
    %c0_6 = arith.constant 0 : index
    %c0_7 = arith.constant 0 : index
    %c0_8 = arith.constant 0 : index
    %6 = vector.load %arg4[%c0_6, %c0_7, %c0_8] : memref<1x2x128xf32, #tpu.memory_space<vmem>>, vector<1x1x128xf32>
    %7 = vector.shape_cast %6 : vector<1x1x128xf32> to vector<128xf32>
    %8 = vector.shape_cast %5 : vector<128xf32> to vector<1x1x128xf32>
    tpu.vector_store %arg4[%c0_6, %c0_7, %c0_8], %8 {strides = array<i32>} : memref<1x2x128xf32, #tpu.memory_space<vmem>>, vector<1x1x128xf32>,
    %9 = arith.mulf %2, %2 : vector<64x128xf32>
    %cst_9 = arith.constant dense<0.000000e+00> : vector<128xf32>
    %10 = vector.multi_reduction <add>, %9, %cst_9 [0] : vector<64x128xf32> to vector<128xf32>
    %c0_10 = arith.constant 0 : index
    %c1 = arith.constant 1 : index
    %c0_11 = arith.constant 0 : index
    %11 = vector.load %arg4[%c0_10, %c1, %c0_11] : memref<1x2x128xf32, #tpu.memory_space<vmem>>, vector<1x1x128xf32>
    %12 = vector.shape_cast %11 : vector<1x1x128xf32> to vector<128xf32>
    %13 = vector.shape_cast %10 : vector<128xf32> to vector<1x1x128xf32>
    tpu.vector_store %arg4[%c0_10, %c1, %c0_11], %13 {strides = array<i32>} : memref<1x2x128xf32, #tpu.memory_space<vmem>>, vector<1x1x128xf32>,
    return
  }
  func.func @transform_0(%arg0: i32) -> (i32, i32) {
    %c0_i32 = arith.constant 0 : i32
    %c0_i32_0 = arith.constant 0 : i32
    return %arg0, %c0_i32 : i32, i32
  }
  func.func @transform_1(%arg0: i32) -> (i32, i32) {
    %c0_i32 = arith.constant 0 : i32
    %c0_i32_0 = arith.constant 0 : i32
    %c0_i32_1 = arith.constant 0 : i32
    return %c0_i32, %c0_i32_0 : i32, i32
  }
  func.func @transform_2(%arg0: i32) -> (i32, i32) {
    %c0_i32 = arith.constant 0 : i32
    %c0_i32_0 = arith.constant 0 : i32
    return %arg0, %c0_i32 : i32, i32
  }
  func.func @transform_3(%arg0: i32) -> (i32, i32, i32) {
    %c0_i32 = arith.constant 0 : i32
    %c0_i32_0 = arith.constant 0 : i32
    %c0_i32_1 = arith.constant 0 : i32
    return %arg0, %c0_i32, %c0_i32_0 : i32, i32, i32
  }
}

module attributes {stable_mosaic.version = 11 : i64} {
  func.func @_conv_stats_kernel(%arg0: i32, %arg1: memref<64x72xbf16, #tpu.memory_space<vmem>>, %arg2: memref<72x128xbf16, #tpu.memory_space<vmem>>, %arg3: memref<64x128xbf16, #tpu.memory_space<vmem>>, %arg4: memref<1x2x128xf32, #tpu.memory_space<vmem>>) attributes {dimension_semantics = [#tpu.dimension_semantics<parallel>], iteration_bounds = array<i64: 2>, scalar_prefetch = 0 : i64, scratch_operands = 0 : i64, tpu.core_type = #tpu.core_type<tc>, window_params = [{transform_indices = @transform_0, window_bounds = array<i64: 64, 72>}, {pipeline_mode = #tpu.pipeline_mode<synchronous>, transform_indices = @transform_1, window_bounds = array<i64: 72, 128>}, {transform_indices = @transform_2, window_bounds = array<i64: 64, 128>}, {transform_indices = @transform_3, window_bounds = array<i64: 1, 2, 128>}]} {
    %c0 = arith.constant 0 : index
    %c0_0 = arith.constant 0 : index
    %0 = vector.load %arg1[%c0, %c0_0] : memref<64x72xbf16, #tpu.memory_space<vmem>>, vector<64x72xbf16>
    %c0_1 = arith.constant 0 : index
    %c0_2 = arith.constant 0 : index
    %1 = vector.load %arg2[%c0_1, %c0_2] : memref<72x128xbf16, #tpu.memory_space<vmem>>, vector<72x128xbf16>
    %cst = arith.constant dense<0.000000e+00> : vector<64x128xf32>
    %2 = tpu.matmul %0, %1, %cst {dimension_numbers = #tpu.dot_dimension_numbers<[1], [0], [0], [1], [0, 0, 1, 1], [], []>} : vector<64x72xbf16>, vector<72x128xbf16>, vector<64x128xf32> -> vector<64x128xf32>
    %3 = arith.truncf %2 : vector<64x128xf32> to vector<64x128xbf16>
    %c0_3 = arith.constant 0 : index
    %c0_4 = arith.constant 0 : index
    %4 = vector.load %arg3[%c0_3, %c0_4] : memref<64x128xbf16, #tpu.memory_space<vmem>>, vector<64x128xbf16>
    tpu.vector_store %arg3[%c0_3, %c0_4], %3 {strides = array<i32>} : memref<64x128xbf16, #tpu.memory_space<vmem>>, vector<64x128xbf16>,
    %cst_5 = arith.constant dense<0.000000e+00> : vector<128xf32>
    %5 = vector.multi_reduction <add>, %2, %cst_5 [0] : vector<64x128xf32> to vector<128xf32>
    %c0_6 = arith.constant 0 : index
    %c0_7 = arith.constant 0 : index
    %c0_8 = arith.constant 0 : index
    %6 = vector.load %arg4[%c0_6, %c0_7, %c0_8] : memref<1x2x128xf32, #tpu.memory_space<vmem>>, vector<1x1x128xf32>
    %7 = vector.shape_cast %6 : vector<1x1x128xf32> to vector<128xf32>
    %8 = vector.shape_cast %5 : vector<128xf32> to vector<1x1x128xf32>
    tpu.vector_store %arg4[%c0_6, %c0_7, %c0_8], %8 {strides = array<i32>} : memref<1x2x128xf32, #tpu.memory_space<vmem>>, vector<1x1x128xf32>,
    %9 = arith.mulf %2, %2 : vector<64x128xf32>
    %cst_9 = arith.constant dense<0.000000e+00> : vector<128xf32>
    %10 = vector.multi_reduction <add>, %9, %cst_9 [0] : vector<64x128xf32> to vector<128xf32>
    %c0_10 = arith.constant 0 : index
    %c1 = arith.constant 1 : index
    %c0_11 = arith.constant 0 : index
    %11 = vector.load %arg4[%c0_10, %c1, %c0_11] : memref<1x2x128xf32, #tpu.memory_space<vmem>>, vector<1x1x128xf32>
    %12 = vector.shape_cast %11 : vector<1x1x128xf32> to vector<128xf32>
    %13 = vector.shape_cast %10 : vector<128xf32> to vector<1x1x128xf32>
    tpu.vector_store %arg4[%c0_10, %c1, %c0_11], %13 {strides = array<i32>} : memref<1x2x128xf32, #tpu.memory_space<vmem>>, vector<1x1x128xf32>,
    return
  }
  func.func @transform_0(%arg0: i32) -> (i32, i32) {
    %c0_i32 = arith.constant 0 : i32
    %c0_i32_0 = arith.constant 0 : i32
    return %arg0, %c0_i32 : i32, i32
  }
  func.func @transform_1(%arg0: i32) -> (i32, i32) {
    %c0_i32 = arith.constant 0 : i32
    %c0_i32_0 = arith.constant 0 : i32
    %c0_i32_1 = arith.constant 0 : i32
    return %c0_i32, %c0_i32_0 : i32, i32
  }
  func.func @transform_2(%arg0: i32) -> (i32, i32) {
    %c0_i32 = arith.constant 0 : i32
    %c0_i32_0 = arith.constant 0 : i32
    return %arg0, %c0_i32 : i32, i32
  }
  func.func @transform_3(%arg0: i32) -> (i32, i32, i32) {
    %c0_i32 = arith.constant 0 : i32
    %c0_i32_0 = arith.constant 0 : i32
    %c0_i32_1 = arith.constant 0 : i32
    return %arg0, %c0_i32, %c0_i32_0 : i32, i32, i32
  }
}

module attributes {stable_mosaic.version = 11 : i64} {
  func.func @_bn_apply_kernel(%arg0: i32, %arg1: memref<64x128xbf16, #tpu.memory_space<vmem>>, %arg2: memref<1x128xf32, #tpu.memory_space<vmem>>, %arg3: memref<1x128xf32, #tpu.memory_space<vmem>>, %arg4: memref<64x128xbf16, #tpu.memory_space<vmem>>, %arg5: memref<1x128xf32, #tpu.memory_space<vmem>>, %arg6: memref<1x128xf32, #tpu.memory_space<vmem>>, %arg7: memref<64x128xf32, #tpu.memory_space<vmem>>) attributes {dimension_semantics = [#tpu.dimension_semantics<parallel>], iteration_bounds = array<i64: 2>, scalar_prefetch = 0 : i64, scratch_operands = 0 : i64, tpu.core_type = #tpu.core_type<tc>, window_params = [{transform_indices = @transform_0, window_bounds = array<i64: 64, 128>}, {pipeline_mode = #tpu.pipeline_mode<synchronous>, transform_indices = @transform_1, window_bounds = array<i64: 1, 128>}, {pipeline_mode = #tpu.pipeline_mode<synchronous>, transform_indices = @transform_2, window_bounds = array<i64: 1, 128>}, {transform_indices = @transform_3, window_bounds = array<i64: 64, 128>}, {pipeline_mode = #tpu.pipeline_mode<synchronous>, transform_indices = @transform_4, window_bounds = array<i64: 1, 128>}, {pipeline_mode = #tpu.pipeline_mode<synchronous>, transform_indices = @transform_5, window_bounds = array<i64: 1, 128>}, {transform_indices = @transform_6, window_bounds = array<i64: 64, 128>}]} {
    %c0 = arith.constant 0 : index
    %c0_0 = arith.constant 0 : index
    %0 = vector.load %arg1[%c0, %c0_0] : memref<64x128xbf16, #tpu.memory_space<vmem>>, vector<64x128xbf16>
    %1 = arith.extf %0 : vector<64x128xbf16> to vector<64x128xf32>
    %c0_1 = arith.constant 0 : index
    %c0_2 = arith.constant 0 : index
    %2 = vector.load %arg2[%c0_1, %c0_2] : memref<1x128xf32, #tpu.memory_space<vmem>>, vector<1x128xf32>
    %3 = vector.broadcast %2 : vector<1x128xf32> to vector<64x128xf32>
    %4 = arith.mulf %1, %3 : vector<64x128xf32>
    %c0_3 = arith.constant 0 : index
    %c0_4 = arith.constant 0 : index
    %5 = vector.load %arg3[%c0_3, %c0_4] : memref<1x128xf32, #tpu.memory_space<vmem>>, vector<1x128xf32>
    %6 = vector.broadcast %5 : vector<1x128xf32> to vector<64x128xf32>
    %7 = arith.addf %4, %6 : vector<64x128xf32>
    %c0_5 = arith.constant 0 : index
    %c0_6 = arith.constant 0 : index
    %8 = vector.load %arg4[%c0_5, %c0_6] : memref<64x128xbf16, #tpu.memory_space<vmem>>, vector<64x128xbf16>
    %9 = arith.extf %8 : vector<64x128xbf16> to vector<64x128xf32>
    %c0_7 = arith.constant 0 : index
    %c0_8 = arith.constant 0 : index
    %10 = vector.load %arg5[%c0_7, %c0_8] : memref<1x128xf32, #tpu.memory_space<vmem>>, vector<1x128xf32>
    %11 = vector.broadcast %10 : vector<1x128xf32> to vector<64x128xf32>
    %12 = arith.mulf %9, %11 : vector<64x128xf32>
    %c0_9 = arith.constant 0 : index
    %c0_10 = arith.constant 0 : index
    %13 = vector.load %arg6[%c0_9, %c0_10] : memref<1x128xf32, #tpu.memory_space<vmem>>, vector<1x128xf32>
    %14 = vector.broadcast %13 : vector<1x128xf32> to vector<64x128xf32>
    %15 = arith.addf %12, %14 : vector<64x128xf32>
    %16 = arith.addf %7, %15 : vector<64x128xf32>
    %cst = arith.constant 0.000000e+00 : f32
    %17 = vector.broadcast %cst : f32 to vector<64x128xf32>
    %18 = arith.maximumf %16, %17 : vector<64x128xf32>
    %c0_11 = arith.constant 0 : index
    %c0_12 = arith.constant 0 : index
    %19 = vector.load %arg7[%c0_11, %c0_12] : memref<64x128xf32, #tpu.memory_space<vmem>>, vector<64x128xf32>
    tpu.vector_store %arg7[%c0_11, %c0_12], %18 {strides = array<i32>} : memref<64x128xf32, #tpu.memory_space<vmem>>, vector<64x128xf32>,
    return
  }
  func.func @transform_0(%arg0: i32) -> (i32, i32) {
    %c0_i32 = arith.constant 0 : i32
    %c0_i32_0 = arith.constant 0 : i32
    return %arg0, %c0_i32 : i32, i32
  }
  func.func @transform_1(%arg0: i32) -> (i32, i32) {
    %c0_i32 = arith.constant 0 : i32
    %c0_i32_0 = arith.constant 0 : i32
    %c0_i32_1 = arith.constant 0 : i32
    return %c0_i32, %c0_i32_0 : i32, i32
  }
  func.func @transform_2(%arg0: i32) -> (i32, i32) {
    %c0_i32 = arith.constant 0 : i32
    %c0_i32_0 = arith.constant 0 : i32
    %c0_i32_1 = arith.constant 0 : i32
    return %c0_i32, %c0_i32_0 : i32, i32
  }
  func.func @transform_3(%arg0: i32) -> (i32, i32) {
    %c0_i32 = arith.constant 0 : i32
    %c0_i32_0 = arith.constant 0 : i32
    return %arg0, %c0_i32 : i32, i32
  }
  func.func @transform_4(%arg0: i32) -> (i32, i32) {
    %c0_i32 = arith.constant 0 : i32
    %c0_i32_0 = arith.constant 0 : i32
    %c0_i32_1 = arith.constant 0 : i32
    return %c0_i32, %c0_i32_0 : i32, i32
  }
  func.func @transform_5(%arg0: i32) -> (i32, i32) {
    %c0_i32 = arith.constant 0 : i32
    %c0_i32_0 = arith.constant 0 : i32
    %c0_i32_1 = arith.constant 0 : i32
    return %c0_i32, %c0_i32_0 : i32, i32
  }
  func.func @transform_6(%arg0: i32) -> (i32, i32) {
    %c0_i32 = arith.constant 0 : i32
    %c0_i32_0 = arith.constant 0 : i32
    return %arg0, %c0_i32 : i32, i32
  }
}

</mosaic_0001>

<llo_original>
// kernel: basic_block_super_forward.4
$region0: #{basic_block_super_forward.4}
  #allocation0 [shape = 'u32[]', space=smem, size = 0x4, offset = 0x4, fixed_abs, tag = 'smem constant byte address 0x4 - core index']
  #allocation1 [shape = 'u32[144,128]{1,0:T(1,128)}', space=vmem, size = 0x12000, scoped, tag = 'internal scratch']
  %s0 = inlined_call_operand.vmem [shape: bf16[128,36], index: 0, kind: input, shape index: {}]
  %s1 = inlined_call_operand.vmem [shape: bf16[36,128], index: 1, kind: input, shape index: {}]
  %s2 = inlined_call_operand.vmem [shape: bf16[128,128], index: 2, kind: output, shape index: {0}]
  %s3 = inlined_call_operand.vmem [shape: f32[2,2,128], index: 3, kind: output, shape index: {1}]
  %4 = xla_tuple %s2, %s3
  %s5 = sld [smem:[#allocation0]]
  $region49: #{basic_block_super_forward.4} parent=0
    _
  %s7 = ssub.s32 1, %s5
  %s8 = scalar_select 0, %s7, %s5
  loop: start=0, step=1, limit=4
  $region2: #{basic_block_super_forward.4} parent=0 // loop_pre_header
    _
  $region3: #{basic_block_super_forward.4} parent=0 // loop_header
    %s10 = sphi 0, %s14
    %p11 = scmp.ge.s32.totalorder %s10, 4
    %s20 = sphi 0, %s22
    %s23 = sphi 0, %s20
    %s24 = sphi 0, %s23
    %s40 = sphi 0, %s24
    %s44 = sphi 0, %s44
    %s46 = sphi 0, %s44
    %s47 = sphi 0, %s46
    %s61 = sphi 0, %s47
    %s67 = sphi 0, %s69
    %s70 = sphi 0, %s67
    %s71 = sphi 0, %s70
    %s87 = sphi 0, %s71
    %s93 = sphi 0, %s95
    %s96 = sphi 0, %s93
    %s97 = sphi 0, %s96
    %s113 = sphi 0, %s97
  $region4: #{basic_block_super_forward.4} parent=0 // loop_header_branch
    %13 = sbr.rel (%p11) target = $region8
  $region5: #{basic_block_super_forward.4} parent=0 // loop_body
    %s15 = ssub.s32 %s10, 1
    %s16 = ssub.s32 %s10, 2
    %s17 = sadd.s32 %s10, 1
    %s18 = ssub.s32 %s10, %s17
    %p19 = scmp.eq.s32.totalorder %s18, 0
    %s21 = sadd.s32 %s20, 1
    %s22 = scalar_select %p19, %s20, %s21
    %p25 = pneg %p19
    %p26 = scmp.eq.s32.totalorder %s10, 1
    %p27 = por %p25, %p26
    %p28 = scmp.ne.s32.totalorder %s20, %s23
    %p29 = scmp.eq.s32.totalorder %s10, 0
    %p30 = por %p28, %p29
    %p31 = scmp.ne.s32.totalorder %s20, %s23
    %p32 = scmp.eq.s32.totalorder %s15, 1
    %p33 = por %p31, %p32
    %p34 = scmp.ne.s32.totalorder %s23, %s24
    %p35 = scmp.eq.s32.totalorder %s15, 0
    %p36 = por %p34, %p35
    %p37 = scmp.ne.s32.totalorder %s23, %s24
    %p38 = scmp.eq.s32.totalorder %s16, 1
    %p39 = por %p37, %p38
    %p41 = scmp.ne.s32.totalorder %s24, %s40
    %p42 = scmp.eq.s32.totalorder %s16, 0
    %p43 = por %p41, %p42
    %s45 = sadd.s32 %s44, 1
    %p48 = scmp.eq.s32.totalorder %s10, 1
    %p49 = scmp.ne.s32.totalorder %s44, %s46
    %p50 = scmp.eq.s32.totalorder %s10, 0
    %p51 = por %p49, %p50
    %p52 = scmp.ne.s32.totalorder %s44, %s46
    %p53 = scmp.eq.s32.totalorder %s15, 1
    %p54 = por %p52, %p53
    %p55 = scmp.ne.s32.totalorder %s46, %s47
    %p56 = scmp.eq.s32.totalorder %s15, 0
    %p57 = por %p55, %p56
    %p58 = scmp.ne.s32.totalorder %s46, %s47
    %p59 = scmp.eq.s32.totalorder %s16, 1
    %p60 = por %p58, %p59
    %p62 = scmp.ne.s32.totalorder %s47, %s61
    %p63 = scmp.eq.s32.totalorder %s16, 0
    %p64 = por %p62, %p63
    %s65 = ssub.s32 %s10, %s17
    %p66 = scmp.eq.s32.totalorder %s65, 0
    %s68 = sadd.s32 %s67, 1
    %s69 = scalar_select %p66, %s67, %s68
    %p72 = pneg %p66
    %p73 = scmp.eq.s32.totalorder %s10, 1
    %p74 = por %p72, %p73
    %p75 = scmp.ne.s32.totalorder %s67, %s70
    %p76 = scmp.eq.s32.totalorder %s10, 0
    %p77 = por %p75, %p76
    %p78 = scmp.ne.s32.totalorder %s67, %s70
    %p79 = scmp.eq.s32.totalorder %s15, 1
    %p80 = por %p78, %p79
    %p81 = scmp.ne.s32.totalorder %s70, %s71
    %p82 = scmp.eq.s32.totalorder %s15, 0
    %p83 = por %p81, %p82
    %p84 = scmp.ne.s32.totalorder %s70, %s71
    %p85 = scmp.eq.s32.totalorder %s16, 1
    %p86 = por %p84, %p85
    %p88 = scmp.ne.s32.totalorder %s71, %s87
    %p89 = scmp.eq.s32.totalorder %s16, 0
    %p90 = por %p88, %p89
    %s91 = ssub.s32 %s10, %s17
    %p92 = scmp.eq.s32.totalorder %s91, 0
    %s94 = sadd.s32 %s93, 1
    %s95 = scalar_select %p92, %s93, %s94
    %p98 = pneg %p92
    %p99 = scmp.eq.s32.totalorder %s10, 1
    %p100 = por %p98, %p99
    %p101 = scmp.ne.s32.totalorder %s93, %s96
    %p102 = scmp.eq.s32.totalorder %s10, 0
    %p103 = por %p101, %p102
    %p104 = scmp.ne.s32.totalorder %s93, %s96
    %p105 = scmp.eq.s32.totalorder %s15, 1
    %p106 = por %p104, %p105
    %p107 = scmp.ne.s32.totalorder %s96, %s97
    %p108 = scmp.eq.s32.totalorder %s15, 0
    %p109 = por %p107, %p108
    %p110 = scmp.ne.s32.totalorder %s96, %s97
    %p111 = scmp.eq.s32.totalorder %s16, 1
    %p112 = por %p110, %p111
    %p114 = scmp.ne.s32.totalorder %s97, %s113
    %p115 = scmp.eq.s32.totalorder %s16, 0
    %p116 = por %p114, %p115
    %p117 = scmp.le.s32.totalorder 1, %s10
    %p118 = scmp.lt.s32.totalorder %s10, 3
    %p119 = pnand %p117, %p118
    %p120 = pneg %p119
    // Predicated region
    $region9: #{basic_block_super_forward.4} parent=5 // pred_check
      _
    $region10: #{basic_block_super_forward.4} parent=5 // pred_check_branch
      %122 = sbr.rel (%p119) target = $region12
    $region11: #{basic_block_super_forward.4} parent=5 // pred_region
      %s123 = ssub.s32 %s10, 1
      // Predicated region
      $region13: #{basic_block_super_forward.4} parent=11 // pred_check
        %p124 = pneg %p57
      $region14: #{basic_block_super_forward.4} parent=11 // pred_check_branch
        %126 = sbr.rel (%p124) target = $region16
      $region15: #{basic_block_super_forward.4} parent=11 // pred_region
        _
      $region16: #{basic_block_super_forward.4} parent=11 // pred_fallthru
        _
    $region12: #{basic_block_super_forward.4} parent=5 // pred_fallthru
      _
    %p127 = scmp.lt.s32.totalorder %s10, 2
    // Predicated region
    $region17: #{basic_block_super_forward.4} parent=5 // pred_check
      %p128 = pneg %p127
    $region18: #{basic_block_super_forward.4} parent=5 // pred_check_branch
      %130 = sbr.rel (%p128) target = $region20
    $region19: #{basic_block_super_forward.4} parent=5 // pred_region
      // Predicated region
      $region21: #{basic_block_super_forward.4} parent=19 // pred_check
        %p131 = pneg %p30
      $region22: #{basic_block_super_forward.4} parent=19 // pred_check_branch
        %133 = sbr.rel (%p131) target = $region24
      $region23: #{basic_block_super_forward.4} parent=19 // pred_region
        %s134 = smul.u32 8, %s10
        %p135 = scmp.lt.s32.totalorder %s134, 15
        %s136 = scalar_select %p135, %s134, 15
        %s137 = smul.addr %s136, 4
        %s138 = scalar_lea.vmem %s0, %s137
        %s139 = smul.u32 8, %s10
      $region24: #{basic_block_super_forward.4} parent=19 // pred_fallthru
        _
    $region20: #{basic_block_super_forward.4} parent=5 // pred_fallthru
      _
    %p140 = scmp.le.s32.totalorder 1, %s10
    %p141 = scmp.lt.s32.totalorder %s10, 3
    %p142 = pnand %p140, %p141
    %p143 = pneg %p142
    // Predicated region
    $region25: #{basic_block_super_forward.4} parent=5 // pred_check
      _
    $region26: #{basic_block_super_forward.4} parent=5 // pred_check_branch
      %145 = sbr.rel (%p142) target = $region28
    $region27: #{basic_block_super_forward.4} parent=5 // pred_region
      %s146 = ssub.s32 %s10, 1
      %s147 = smul.u32 8, %s15
      %p148 = scmp.lt.s32.totalorder %s147, 15
      %s149 = scalar_select %p148, %s147, 15
      %s150 = smul.addr %s149, 4
      %s151 = scalar_lea.vmem %s0, %s150
      %p152 = pneg %p36
      %p153 = pneg %p33
      %p154 = pneg %p57
      %p155 = pneg %p54
      %p156 = pneg %p83
      %p157 = pneg %p80
      %s158 = smul.u32 8, %s15
      %p159 = scmp.lt.s32.totalorder %s158, 15
      %s160 = scalar_select %p159, %s158, 15
      %s161 = smul.addr %s160, 4
      %s162 = scalar_lea.vmem %s2, %s161
      %p163 = pneg %p109
      %p164 = pneg %p106
      %p165 = scmp.lt.s32.totalorder %s15, 1
      %s166 = scalar_select %p165, %s15, 1
      %s167 = smul.addr %s166, 2
      %s168 = scalar_lea.vmem %s3, %s167
      %s169 = smul.u32 8, %s15
      %p170 = scmp.lt.s32.totalorder %s169, 15
      %s171 = scalar_select %p170, %s169, 15
      %s172 = smul.addr %s171, 4
      %s173 = scalar_lea.vmem %s0, %s172
      %s174 = smul.u32 8, %s15
      %s175 = smul.u32 8, %s15
      %p176 = scmp.lt.s32.totalorder %s175, 15
      %s177 = scalar_select %p176, %s175, 15
      %s178 = smul.addr %s177, 4
      %s179 = scalar_lea.vmem %s2, %s178
      %s180 = smul.u32 8, %s15
      %p181 = scmp.lt.s32.totalorder %s15, 1
      %s182 = scalar_select %p181, %s15, 1
      %s183 = smul.addr %s182, 2
      %s184 = scalar_lea.vmem %s3, %s183
      %v186 = vld [vmem:[%s173] sm:$0xf]
      %v187 = vld [vmem:[%s173 + $0x4] sm:$0xf]
      %v188 = vld [vmem:[%s173 + $0x8] sm:$0xf]
      %v189 = vld [vmem:[%s173 + $0xc] sm:$0xf]
      %v190 = vld [vmem:[%s173 + $0x10] sm:$0xf]
      %v191 = vld [vmem:[%s173 + $0x14] sm:$0xf]
      %v192 = vld [vmem:[%s173 + $0x18] sm:$0xf]
      %v193 = vld [vmem:[%s173 + $0x1c] sm:$0xf]
      %v194 = vld [vmem:[%s1] sm:$0xf]
      %v195 = vld [vmem:[%s1 + $0x4] sm:$0xf]
      %v196 = vld [vmem:[%s1 + $0x8] sm:$0xf]
      %v197 = vld [vmem:[%s1 + $0xc] sm:$0xf]
      %v198 = vld [vmem:[%s1 + $0x10] sm:$0x3]
      %v207 = vunpack.c.l.b16 %v186
      %v208 = vunpack.c.l.b16 %v187
      %v209 = vunpack.c.l.b16 %v188
      %v210 = vunpack.c.l.b16 %v189
      %v211 = vunpack.c.l.b16 %v190
      %v212 = vunpack.c.l.b16 %v191
      %v213 = vunpack.c.l.b16 %v192
      %v214 = vunpack.c.l.b16 %v193
      %v215 = vpack.c.b16 %v208, %v207
      %v216 = vpack.c.b16 %v210, %v209
      %v217 = vpack.c.b16 %v212, %v211
      %v218 = vpack.c.b16 %v214, %v213
      %v224 = vunpack.c.l.b16 %v194
      %v225 = vunpack.c.l.b16 %v195
      %v226 = vunpack.c.l.b16 %v196
      %v227 = vunpack.c.l.b16 %v197
      %v228 = vunpack.c.l.b16 %v198
      %v229 = vpack.c.b16 %v225, %v224
      %v230 = vpack.c.b16 %v227, %v226
      %v231 = vpack.c.b16 %v228, %v228
      %vm234 = vcmask 293888
      %v236 = vsel %vm234, %v215, 0
      %v239 = vsel %vm234, %v216, 0
      %v242 = vsel %vm234, %v217, 0
      %v245 = vsel %vm234, %v218, 0
      %vm247 = vcmask 1041408
      %v249 = vsel %vm247, %v231, 0
      %251 = vmatprep.subr.bf16.mxu0 0
      %252 = vmatpush1.bf16.msra.mxu0 %v229
      %253 = vmatprep.subr.bf16.mxu0 0
      %254 = vmatpush1.bf16.msra.mxu0 %v230
      %255 = vmatprep.subr.bf16.mxu0 0
      %256 = vmatpush1.bf16.msra.mxu0 %v249
      %257 = vmatprep.subr.bf16.mxu0 0
      %258 = vmatpush1.bf16.msra.mxu0 0
      %259 = vmatprep.subr.bf16.mxu0 0
      %260 = vmatpush1.bf16.msra.mxu0 0
      %261 = vmatprep.subr.bf16.mxu0 0
      %262 = vmatpush1.bf16.msra.mxu0 0
      %263 = vmatprep.subr.bf16.mxu0 0
      %264 = vmatpush1.bf16.msra.mxu0 0
      %265 = vmatprep.subr.bf16.mxu0 0
      %266 = vmatpush1.bf16.msra.mxu0 0
      %267 = vmatprep.subr.bf16.mxu0 0
      %268 = vmatpush1.bf16.msra.mxu0 0
      %269 = vmatprep.subr.bf16.mxu0 0
      %270 = vmatpush1.bf16.msra.mxu0 0
      %271 = vmatprep.subr.bf16.mxu0 0
      %272 = vmatpush1.bf16.msra.mxu0 0
      %273 = vmatprep.subr.bf16.mxu0 0
      %274 = vmatpush1.bf16.msra.mxu0 0
      %275 = vmatprep.subr.bf16.mxu0 0
      %276 = vmatpush1.bf16.msra.mxu0 0
      %277 = vmatprep.subr.bf16.mxu0 0
      %278 = vmatpush1.bf16.msra.mxu0 0
      %279 = vmatprep.subr.bf16.mxu0 0
      %280 = vmatpush1.bf16.msra.mxu0 0
      %281 = vmatprep.subr.bf16.mxu0 0
      %282 = vmatpush1.bf16.msra.mxu0 0
      %283 = vmatprep.mubr.bf16.mxu0 0
      %284 = vmatmul.mubr.bf16.gmra.mrb[0].mxu0 %v236
      %v285 = vpop.f32.mrb[0].mxu0
      %v286 = vadd.f32 0.0, %v285
      %v287 = vpop.f32.mrb[0].mxu0
      %v288 = vpop.f32.mrb[0].mxu0
      %v289 = vadd.f32 0.0, %v288
      %v290 = vpop.f32.mrb[0].mxu0
      %291 = vmatprep.mubr.bf16.mxu0 0
      %292 = vmatmul.mubr.bf16.gmra.mrb[0].mxu0 %v239
      %v293 = vpop.f32.mrb[0].mxu0
      %v294 = vadd.f32 0.0, %v293
      %v295 = vpop.f32.mrb[0].mxu0
      %v296 = vpop.f32.mrb[0].mxu0
      %v297 = vadd.f32 0.0, %v296
      %v298 = vpop.f32.mrb[0].mxu0
      %299 = vmatprep.mubr.bf16.mxu0 0
      %300 = vmatmul.mubr.bf16.gmra.mrb[0].mxu0 %v242
      %v301 = vpop.f32.mrb[0].mxu0
      %v302 = vadd.f32 0.0, %v301
      %v303 = vpop.f32.mrb[0].mxu0
      %v304 = vpop.f32.mrb[0].mxu0
      %v305 = vadd.f32 0.0, %v304
      %v306 = vpop.f32.mrb[0].mxu0
      %307 = vmatprep.mubr.bf16.mxu0 0
      %308 = vmatmul.mubr.bf16.gmra.mrb[0].mxu0 %v245
      %v309 = vpop.f32.mrb[0].mxu0
      %v310 = vadd.f32 0.0, %v309
      %v311 = vpop.f32.mrb[0].mxu0
      %v312 = vpop.f32.mrb[0].mxu0
      %v313 = vadd.f32 0.0, %v312
      %v314 = vpop.f32.mrb[0].mxu0
      %315 = vdwg.mxu0
      %v316 = vpack.c.bf16 %v289, %v286
      %v317 = vpack.c.bf16 %v297, %v294
      %v318 = vpack.c.bf16 %v305, %v302
      %v319 = vpack.c.bf16 %v313, %v310
      %v324 = vunpack.c.l.b16 %v316
      %v325 = vunpack.c.h.b16 %v316
      %v326 = vunpack.c.l.b16 %v317
      %v327 = vunpack.c.h.b16 %v317
      %v328 = vunpack.c.l.b16 %v318
      %v329 = vunpack.c.h.b16 %v318
      %v330 = vunpack.c.l.b16 %v319
      %v331 = vunpack.c.h.b16 %v319
      %v332 = vpack.c.b16 %v324, %v324
      %v333 = vpack.c.b16 %v325, %v325
      %v334 = vpack.c.b16 %v326, %v326
      %v335 = vpack.c.b16 %v327, %v327
      %v336 = vpack.c.b16 %v328, %v328
      %v337 = vpack.c.b16 %v329, %v329
      %v338 = vpack.c.b16 %v330, %v330
      %v339 = vpack.c.b16 %v331, %v331
      %348 = vst [vmem:[%s179] sm:$0xf] %v332
      %349 = vst [vmem:[%s179 + $0x4] sm:$0xf] %v333
      %350 = vst [vmem:[%s179 + $0x8] sm:$0xf] %v334
      %351 = vst [vmem:[%s179 + $0xc] sm:$0xf] %v335
      %352 = vst [vmem:[%s179 + $0x10] sm:$0xf] %v336
      %353 = vst [vmem:[%s179 + $0x14] sm:$0xf] %v337
      %354 = vst [vmem:[%s179 + $0x18] sm:$0xf] %v338
      %355 = vst [vmem:[%s179 + $0x1c] sm:$0xf] %v339
      %v356 = vadd.f32 %v286, %v289
      %v357 = vadd.f32 %v356, %v294
      %v358 = vadd.f32 %v357, %v297
      %v359 = vadd.f32 %v358, %v302
      %v360 = vadd.f32 %v359, %v305
      %v361 = vadd.f32 %v360, %v310
      %v362 = vadd.f32 %v361, %v313
      %v363 = vrot.slane %v362, 4
      %v364 = vadd.f32 %v362, %v363
      %v365 = vrot.slane %v364, 2
      %v366 = vadd.f32 %v364, %v365
      %v367 = vrot.slane %v366, 1
      %v368 = vadd.f32 %v366, %v367
      %369 = vst [vmem:[%s184] sm:$0x1] %v368
      %v370 = vmul.f32 %v286, %v286
      %v371 = vmul.f32 %v289, %v289
      %v372 = vmul.f32 %v294, %v294
      %v373 = vmul.f32 %v297, %v297
      %v374 = vmul.f32 %v302, %v302
      %v375 = vmul.f32 %v305, %v305
      %v376 = vmul.f32 %v310, %v310
      %v377 = vmul.f32 %v313, %v313
      %v378 = vadd.f32 %v370, %v371
      %v379 = vadd.f32 %v378, %v372
      %v380 = vadd.f32 %v379, %v373
      %v381 = vadd.f32 %v380, %v374
      %v382 = vadd.f32 %v381, %v375
      %v383 = vadd.f32 %v382, %v376
      %v384 = vadd.f32 %v383, %v377
      %v385 = vrot.slane %v384, 4
      %v386 = vadd.f32 %v384, %v385
      %v387 = vrot.slane %v386, 2
      %v388 = vadd.f32 %v386, %v387
      %v389 = vrot.slane %v388, 1
      %v390 = vadd.f32 %v388, %v389
      %391 = vst [vmem:[%s184 + $0x1] sm:$0x1] %v390
      %s392 = smul.u32 8, %s15
      %p393 = scmp.lt.s32.totalorder %s392, 15
      %s394 = scalar_select %p393, %s392, 15
      %s395 = smul.addr %s394, 4
      %s396 = scalar_lea.vmem %s2, %s395
      %p397 = scmp.lt.s32.totalorder %s15, 1
      %s398 = scalar_select %p397, %s15, 1
      %s399 = smul.addr %s398, 2
      %s400 = scalar_lea.vmem %s3, %s399
      // Predicated region
      $region29: #{basic_block_super_forward.4} parent=27 // pred_check
        %p401 = pneg %p80
      $region30: #{basic_block_super_forward.4} parent=27 // pred_check_branch
        %403 = sbr.rel (%p401) target = $region32
      $region31: #{basic_block_super_forward.4} parent=27 // pred_region
        %s404 = smul.u32 8, %s15
      $region32: #{basic_block_super_forward.4} parent=27 // pred_fallthru
        _
      // Predicated region
      $region33: #{basic_block_super_forward.4} parent=27 // pred_check
        %p405 = pneg %p106
      $region34: #{basic_block_super_forward.4} parent=27 // pred_check_branch
        %407 = sbr.rel (%p405) target = $region36
      $region35: #{basic_block_super_forward.4} parent=27 // pred_region
        _
      $region36: #{basic_block_super_forward.4} parent=27 // pred_fallthru
        _
    $region28: #{basic_block_super_forward.4} parent=5 // pred_fallthru
      _
    %p408 = scmp.le.s32.totalorder 2, %s10
    // Predicated region
    $region37: #{basic_block_super_forward.4} parent=5 // pred_check
      %p409 = pneg %p408
    $region38: #{basic_block_super_forward.4} parent=5 // pred_check_branch
      %411 = sbr.rel (%p409) target = $region40
    $region39: #{basic_block_super_forward.4} parent=5 // pred_region
      %s412 = ssub.s32 %s10, 2
      // Predicated region
      $region41: #{basic_block_super_forward.4} parent=39 // pred_check
        %p413 = pneg %p86
      $region42: #{basic_block_super_forward.4} parent=39 // pred_check_branch
        %415 = sbr.rel (%p413) target = $region44
      $region43: #{basic_block_super_forward.4} parent=39 // pred_region
        %s416 = smul.u32 8, %s16
        %p417 = scmp.lt.s32.totalorder %s416, 15
        %s418 = scalar_select %p417, %s416, 15
        %s419 = smul.addr %s418, 4
        %s420 = scalar_lea.vmem %s2, %s419
      $region44: #{basic_block_super_forward.4} parent=39 // pred_fallthru
        _
      // Predicated region
      $region45: #{basic_block_super_forward.4} parent=39 // pred_check
        %p421 = pneg %p112
      $region46: #{basic_block_super_forward.4} parent=39 // pred_check_branch
        %423 = sbr.rel (%p421) target = $region48
      $region47: #{basic_block_super_forward.4} parent=39 // pred_region
        %p424 = scmp.lt.s32.totalorder %s16, 1
        %s425 = scalar_select %p424, %s16, 1
        %s426 = smul.addr %s425, 2
        %s427 = scalar_lea.vmem %s3, %s426
      $region48: #{basic_block_super_forward.4} parent=39 // pred_fallthru
        _
    $region40: #{basic_block_super_forward.4} parent=5 // pred_fallthru
      _
  $region6: #{basic_block_super_forward.4} parent=0 // loop_footer
    %s14 = sadd.s32 1, %s10
  $region7: #{basic_block_super_forward.4} parent=0 // loop_footer_branch
    %9 = sbr.rel target = $region3
  $region8: #{basic_block_super_forward.4} parent=0 // loop_exit
    _

// kernel: basic_block_super_forward.5
$region0: #{basic_block_super_forward.5}
  #allocation0 [shape = 'u32[]', space=smem, size = 0x4, offset = 0x4, fixed_abs, tag = 'smem constant byte address 0x4 - core index']
  #allocation1 [shape = 'u32[144,128]{1,0:T(1,128)}', space=vmem, size = 0x12000, scoped, tag = 'internal scratch']
  %s0 = inlined_call_operand.vmem [shape: bf16[128,4], index: 0, kind: input, shape index: {}]
  %s1 = inlined_call_operand.vmem [shape: bf16[4,128], index: 1, kind: input, shape index: {}]
  %s2 = inlined_call_operand.vmem [shape: bf16[128,128], index: 2, kind: output, shape index: {0}]
  %s3 = inlined_call_operand.vmem [shape: f32[2,2,128], index: 3, kind: output, shape index: {1}]
  %4 = xla_tuple %s2, %s3
  %s5 = sld [smem:[#allocation0]]
  $region49: #{basic_block_super_forward.5} parent=0
    _
  %s7 = ssub.s32 1, %s5
  %s8 = scalar_select 0, %s7, %s5
  loop: start=0, step=1, limit=4
  $region2: #{basic_block_super_forward.5} parent=0 // loop_pre_header
    _
  $region3: #{basic_block_super_forward.5} parent=0 // loop_header
    %s10 = sphi 0, %s14
    %p11 = scmp.ge.s32.totalorder %s10, 4
    %s20 = sphi 0, %s22
    %s23 = sphi 0, %s20
    %s24 = sphi 0, %s23
    %s40 = sphi 0, %s24
    %s44 = sphi 0, %s44
    %s46 = sphi 0, %s44
    %s47 = sphi 0, %s46
    %s61 = sphi 0, %s47
    %s67 = sphi 0, %s69
    %s70 = sphi 0, %s67
    %s71 = sphi 0, %s70
    %s87 = sphi 0, %s71
    %s93 = sphi 0, %s95
    %s96 = sphi 0, %s93
    %s97 = sphi 0, %s96
    %s113 = sphi 0, %s97
  $region4: #{basic_block_super_forward.5} parent=0 // loop_header_branch
    %13 = sbr.rel (%p11) target = $region8
  $region5: #{basic_block_super_forward.5} parent=0 // loop_body
    %s15 = ssub.s32 %s10, 1
    %s16 = ssub.s32 %s10, 2
    %s17 = sadd.s32 %s10, 1
    %s18 = ssub.s32 %s10, %s17
    %p19 = scmp.eq.s32.totalorder %s18, 0
    %s21 = sadd.s32 %s20, 1
    %s22 = scalar_select %p19, %s20, %s21
    %p25 = pneg %p19
    %p26 = scmp.eq.s32.totalorder %s10, 1
    %p27 = por %p25, %p26
    %p28 = scmp.ne.s32.totalorder %s20, %s23
    %p29 = scmp.eq.s32.totalorder %s10, 0
    %p30 = por %p28, %p29
    %p31 = scmp.ne.s32.totalorder %s20, %s23
    %p32 = scmp.eq.s32.totalorder %s15, 1
    %p33 = por %p31, %p32
    %p34 = scmp.ne.s32.totalorder %s23, %s24
    %p35 = scmp.eq.s32.totalorder %s15, 0
    %p36 = por %p34, %p35
    %p37 = scmp.ne.s32.totalorder %s23, %s24
    %p38 = scmp.eq.s32.totalorder %s16, 1
    %p39 = por %p37, %p38
    %p41 = scmp.ne.s32.totalorder %s24, %s40
    %p42 = scmp.eq.s32.totalorder %s16, 0
    %p43 = por %p41, %p42
    %s45 = sadd.s32 %s44, 1
    %p48 = scmp.eq.s32.totalorder %s10, 1
    %p49 = scmp.ne.s32.totalorder %s44, %s46
    %p50 = scmp.eq.s32.totalorder %s10, 0
    %p51 = por %p49, %p50
    %p52 = scmp.ne.s32.totalorder %s44, %s46
    %p53 = scmp.eq.s32.totalorder %s15, 1
    %p54 = por %p52, %p53
    %p55 = scmp.ne.s32.totalorder %s46, %s47
    %p56 = scmp.eq.s32.totalorder %s15, 0
    %p57 = por %p55, %p56
    %p58 = scmp.ne.s32.totalorder %s46, %s47
    %p59 = scmp.eq.s32.totalorder %s16, 1
    %p60 = por %p58, %p59
    %p62 = scmp.ne.s32.totalorder %s47, %s61
    %p63 = scmp.eq.s32.totalorder %s16, 0
    %p64 = por %p62, %p63
    %s65 = ssub.s32 %s10, %s17
    %p66 = scmp.eq.s32.totalorder %s65, 0
    %s68 = sadd.s32 %s67, 1
    %s69 = scalar_select %p66, %s67, %s68
    %p72 = pneg %p66
    %p73 = scmp.eq.s32.totalorder %s10, 1
    %p74 = por %p72, %p73
    %p75 = scmp.ne.s32.totalorder %s67, %s70
    %p76 = scmp.eq.s32.totalorder %s10, 0
    %p77 = por %p75, %p76
    %p78 = scmp.ne.s32.totalorder %s67, %s70
    %p79 = scmp.eq.s32.totalorder %s15, 1
    %p80 = por %p78, %p79
    %p81 = scmp.ne.s32.totalorder %s70, %s71
    %p82 = scmp.eq.s32.totalorder %s15, 0
    %p83 = por %p81, %p82
    %p84 = scmp.ne.s32.totalorder %s70, %s71
    %p85 = scmp.eq.s32.totalorder %s16, 1
    %p86 = por %p84, %p85
    %p88 = scmp.ne.s32.totalorder %s71, %s87
    %p89 = scmp.eq.s32.totalorder %s16, 0
    %p90 = por %p88, %p89
    %s91 = ssub.s32 %s10, %s17
    %p92 = scmp.eq.s32.totalorder %s91, 0
    %s94 = sadd.s32 %s93, 1
    %s95 = scalar_select %p92, %s93, %s94
    %p98 = pneg %p92
    %p99 = scmp.eq.s32.totalorder %s10, 1
    %p100 = por %p98, %p99
    %p101 = scmp.ne.s32.totalorder %s93, %s96
    %p102 = scmp.eq.s32.totalorder %s10, 0
    %p103 = por %p101, %p102
    %p104 = scmp.ne.s32.totalorder %s93, %s96
    %p105 = scmp.eq.s32.totalorder %s15, 1
    %p106 = por %p104, %p105
    %p107 = scmp.ne.s32.totalorder %s96, %s97
    %p108 = scmp.eq.s32.totalorder %s15, 0
    %p109 = por %p107, %p108
    %p110 = scmp.ne.s32.totalorder %s96, %s97
    %p111 = scmp.eq.s32.totalorder %s16, 1
    %p112 = por %p110, %p111
    %p114 = scmp.ne.s32.totalorder %s97, %s113
    %p115 = scmp.eq.s32.totalorder %s16, 0
    %p116 = por %p114, %p115
    %p117 = scmp.le.s32.totalorder 1, %s10
    %p118 = scmp.lt.s32.totalorder %s10, 3
    %p119 = pnand %p117, %p118
    %p120 = pneg %p119
    // Predicated region
    $region9: #{basic_block_super_forward.5} parent=5 // pred_check
      _
    $region10: #{basic_block_super_forward.5} parent=5 // pred_check_branch
      %122 = sbr.rel (%p119) target = $region12
    $region11: #{basic_block_super_forward.5} parent=5 // pred_region
      %s123 = ssub.s32 %s10, 1
      // Predicated region
      $region13: #{basic_block_super_forward.5} parent=11 // pred_check
        %p124 = pneg %p57
      $region14: #{basic_block_super_forward.5} parent=11 // pred_check_branch
        %126 = sbr.rel (%p124) target = $region16
      $region15: #{basic_block_super_forward.5} parent=11 // pred_region
        _
      $region16: #{basic_block_super_forward.5} parent=11 // pred_fallthru
        _
    $region12: #{basic_block_super_forward.5} parent=5 // pred_fallthru
      _
    %p127 = scmp.lt.s32.totalorder %s10, 2
    // Predicated region
    $region17: #{basic_block_super_forward.5} parent=5 // pred_check
      %p128 = pneg %p127
    $region18: #{basic_block_super_forward.5} parent=5 // pred_check_branch
      %130 = sbr.rel (%p128) target = $region20
    $region19: #{basic_block_super_forward.5} parent=5 // pred_region
      // Predicated region
      $region21: #{basic_block_super_forward.5} parent=19 // pred_check
        %p131 = pneg %p30
      $region22: #{basic_block_super_forward.5} parent=19 // pred_check_branch
        %133 = sbr.rel (%p131) target = $region24
      $region23: #{basic_block_super_forward.5} parent=19 // pred_region
        %s134 = smul.u32 8, %s10
        %p135 = scmp.lt.s32.totalorder %s134, 15
        %s136 = scalar_select %p135, %s134, 15
        %s137 = smul.addr %s136, 4
        %s138 = scalar_lea.vmem %s0, %s137
        %s139 = smul.u32 8, %s10
      $region24: #{basic_block_super_forward.5} parent=19 // pred_fallthru
        _
    $region20: #{basic_block_super_forward.5} parent=5 // pred_fallthru
      _
    %p140 = scmp.le.s32.totalorder 1, %s10
    %p141 = scmp.lt.s32.totalorder %s10, 3
    %p142 = pnand %p140, %p141
    %p143 = pneg %p142
    // Predicated region
    $region25: #{basic_block_super_forward.5} parent=5 // pred_check
      _
    $region26: #{basic_block_super_forward.5} parent=5 // pred_check_branch
      %145 = sbr.rel (%p142) target = $region28
    $region27: #{basic_block_super_forward.5} parent=5 // pred_region
      %s146 = ssub.s32 %s10, 1
      %s147 = smul.u32 8, %s15
      %p148 = scmp.lt.s32.totalorder %s147, 15
      %s149 = scalar_select %p148, %s147, 15
      %s150 = smul.addr %s149, 4
      %s151 = scalar_lea.vmem %s0, %s150
      %p152 = pneg %p36
      %p153 = pneg %p33
      %p154 = pneg %p57
      %p155 = pneg %p54
      %p156 = pneg %p83
      %p157 = pneg %p80
      %s158 = smul.u32 8, %s15
      %p159 = scmp.lt.s32.totalorder %s158, 15
      %s160 = scalar_select %p159, %s158, 15
      %s161 = smul.addr %s160, 4
      %s162 = scalar_lea.vmem %s2, %s161
      %p163 = pneg %p109
      %p164 = pneg %p106
      %p165 = scmp.lt.s32.totalorder %s15, 1
      %s166 = scalar_select %p165, %s15, 1
      %s167 = smul.addr %s166, 2
      %s168 = scalar_lea.vmem %s3, %s167
      %s169 = smul.u32 8, %s15
      %p170 = scmp.lt.s32.totalorder %s169, 15
      %s171 = scalar_select %p170, %s169, 15
      %s172 = smul.addr %s171, 4
      %s173 = scalar_lea.vmem %s0, %s172
      %s174 = smul.u32 8, %s15
      %s175 = smul.u32 8, %s15
      %p176 = scmp.lt.s32.totalorder %s175, 15
      %s177 = scalar_select %p176, %s175, 15
      %s178 = smul.addr %s177, 4
      %s179 = scalar_lea.vmem %s2, %s178
      %s180 = smul.u32 8, %s15
      %p181 = scmp.lt.s32.totalorder %s15, 1
      %s182 = scalar_select %p181, %s15, 1
      %s183 = smul.addr %s182, 2
      %s184 = scalar_lea.vmem %s3, %s183
      %v186 = vld [vmem:[%s173] sm:$0xf]
      %v187 = vld [vmem:[%s173 + $0x4] sm:$0xf]
      %v188 = vld [vmem:[%s173 + $0x8] sm:$0xf]
      %v189 = vld [vmem:[%s173 + $0xc] sm:$0xf]
      %v190 = vld [vmem:[%s173 + $0x10] sm:$0xf]
      %v191 = vld [vmem:[%s173 + $0x14] sm:$0xf]
      %v192 = vld [vmem:[%s173 + $0x18] sm:$0xf]
      %v193 = vld [vmem:[%s173 + $0x1c] sm:$0xf]
      %v194 = vld [vmem:[%s1] sm:$0x3]
      %v203 = vunpack.c.l.b16 %v186
      %v204 = vunpack.c.l.b16 %v187
      %v205 = vunpack.c.l.b16 %v188
      %v206 = vunpack.c.l.b16 %v189
      %v207 = vunpack.c.l.b16 %v190
      %v208 = vunpack.c.l.b16 %v191
      %v209 = vunpack.c.l.b16 %v192
      %v210 = vunpack.c.l.b16 %v193
      %v211 = vpack.c.b16 %v204, %v203
      %v212 = vpack.c.b16 %v206, %v205
      %v213 = vpack.c.b16 %v208, %v207
      %v214 = vpack.c.b16 %v210, %v209
      %vm215 = vcmask 31744
      %v217 = vsel %vm215, %v211, 0
      %v220 = vsel %vm215, %v212, 0
      %v223 = vsel %vm215, %v213, 0
      %v226 = vsel %vm215, %v214, 0
      %vm228 = vcmask 1041408
      %v230 = vsel %vm228, %v194, 0
      %232 = vmatprep.subr.bf16.mxu0 0
      %233 = vmatpush1.bf16.msra.mxu0 %v230
      %234 = vmatprep.subr.bf16.mxu0 0
      %235 = vmatpush1.bf16.msra.mxu0 0
      %236 = vmatprep.subr.bf16.mxu0 0
      %237 = vmatpush1.bf16.msra.mxu0 0
      %238 = vmatprep.subr.bf16.mxu0 0
      %239 = vmatpush1.bf16.msra.mxu0 0
      %240 = vmatprep.subr.bf16.mxu0 0
      %241 = vmatpush1.bf16.msra.mxu0 0
      %242 = vmatprep.subr.bf16.mxu0 0
      %243 = vmatpush1.bf16.msra.mxu0 0
      %244 = vmatprep.subr.bf16.mxu0 0
      %245 = vmatpush1.bf16.msra.mxu0 0
      %246 = vmatprep.subr.bf16.mxu0 0
      %247 = vmatpush1.bf16.msra.mxu0 0
      %248 = vmatprep.subr.bf16.mxu0 0
      %249 = vmatpush1.bf16.msra.mxu0 0
      %250 = vmatprep.subr.bf16.mxu0 0
      %251 = vmatpush1.bf16.msra.mxu0 0
      %252 = vmatprep.subr.bf16.mxu0 0
      %253 = vmatpush1.bf16.msra.mxu0 0
      %254 = vmatprep.subr.bf16.mxu0 0
      %255 = vmatpush1.bf16.msra.mxu0 0
      %256 = vmatprep.subr.bf16.mxu0 0
      %257 = vmatpush1.bf16.msra.mxu0 0
      %258 = vmatprep.subr.bf16.mxu0 0
      %259 = vmatpush1.bf16.msra.mxu0 0
      %260 = vmatprep.subr.bf16.mxu0 0
      %261 = vmatpush1.bf16.msra.mxu0 0
      %262 = vmatprep.subr.bf16.mxu0 0
      %263 = vmatpush1.bf16.msra.mxu0 0
      %264 = vmatprep.mubr.bf16.mxu0 0
      %265 = vmatmul.mubr.bf16.gmra.mrb[0].mxu0 %v217
      %v266 = vpop.f32.mrb[0].mxu0
      %v267 = vadd.f32 0.0, %v266
      %v268 = vpop.f32.mrb[0].mxu0
      %v269 = vpop.f32.mrb[0].mxu0
      %v270 = vadd.f32 0.0, %v269
      %v271 = vpop.f32.mrb[0].mxu0
      %272 = vmatprep.mubr.bf16.mxu0 0
      %273 = vmatmul.mubr.bf16.gmra.mrb[0].mxu0 %v220
      %v274 = vpop.f32.mrb[0].mxu0
      %v275 = vadd.f32 0.0, %v274
      %v276 = vpop.f32.mrb[0].mxu0
      %v277 = vpop.f32.mrb[0].mxu0
      %v278 = vadd.f32 0.0, %v277
      %v279 = vpop.f32.mrb[0].mxu0
      %280 = vmatprep.mubr.bf16.mxu0 0
      %281 = vmatmul.mubr.bf16.gmra.mrb[0].mxu0 %v223
      %v282 = vpop.f32.mrb[0].mxu0
      %v283 = vadd.f32 0.0, %v282
      %v284 = vpop.f32.mrb[0].mxu0
      %v285 = vpop.f32.mrb[0].mxu0
      %v286 = vadd.f32 0.0, %v285
      %v287 = vpop.f32.mrb[0].mxu0
      %288 = vmatprep.mubr.bf16.mxu0 0
      %289 = vmatmul.mubr.bf16.gmra.mrb[0].mxu0 %v226
      %v290 = vpop.f32.mrb[0].mxu0
      %v291 = vadd.f32 0.0, %v290
      %v292 = vpop.f32.mrb[0].mxu0
      %v293 = vpop.f32.mrb[0].mxu0
      %v294 = vadd.f32 0.0, %v293
      %v295 = vpop.f32.mrb[0].mxu0
      %296 = vdwg.mxu0
      %v297 = vpack.c.bf16 %v270, %v267
      %v298 = vpack.c.bf16 %v278, %v275
      %v299 = vpack.c.bf16 %v286, %v283
      %v300 = vpack.c.bf16 %v294, %v291
      %v305 = vunpack.c.l.b16 %v297
      %v306 = vunpack.c.h.b16 %v297
      %v307 = vunpack.c.l.b16 %v298
      %v308 = vunpack.c.h.b16 %v298
      %v309 = vunpack.c.l.b16 %v299
      %v310 = vunpack.c.h.b16 %v299
      %v311 = vunpack.c.l.b16 %v300
      %v312 = vunpack.c.h.b16 %v300
      %v313 = vpack.c.b16 %v305, %v305
      %v314 = vpack.c.b16 %v306, %v306
      %v315 = vpack.c.b16 %v307, %v307
      %v316 = vpack.c.b16 %v308, %v308
      %v317 = vpack.c.b16 %v309, %v309
      %v318 = vpack.c.b16 %v310, %v310
      %v319 = vpack.c.b16 %v311, %v311
      %v320 = vpack.c.b16 %v312, %v312
      %329 = vst [vmem:[%s179] sm:$0xf] %v313
      %330 = vst [vmem:[%s179 + $0x4] sm:$0xf] %v314
      %331 = vst [vmem:[%s179 + $0x8] sm:$0xf] %v315
      %332 = vst [vmem:[%s179 + $0xc] sm:$0xf] %v316
      %333 = vst [vmem:[%s179 + $0x10] sm:$0xf] %v317
      %334 = vst [vmem:[%s179 + $0x14] sm:$0xf] %v318
      %335 = vst [vmem:[%s179 + $0x18] sm:$0xf] %v319
      %336 = vst [vmem:[%s179 + $0x1c] sm:$0xf] %v320
      %v337 = vadd.f32 %v267, %v270
      %v338 = vadd.f32 %v337, %v275
      %v339 = vadd.f32 %v338, %v278
      %v340 = vadd.f32 %v339, %v283
      %v341 = vadd.f32 %v340, %v286
      %v342 = vadd.f32 %v341, %v291
      %v343 = vadd.f32 %v342, %v294
      %v344 = vrot.slane %v343, 4
      %v345 = vadd.f32 %v343, %v344
      %v346 = vrot.slane %v345, 2
      %v347 = vadd.f32 %v345, %v346
      %v348 = vrot.slane %v347, 1
      %v349 = vadd.f32 %v347, %v348
      %350 = vst [vmem:[%s184] sm:$0x1] %v349
      %v351 = vmul.f32 %v267, %v267
      %v352 = vmul.f32 %v270, %v270
      %v353 = vmul.f32 %v275, %v275
      %v354 = vmul.f32 %v278, %v278
      %v355 = vmul.f32 %v283, %v283
      %v356 = vmul.f32 %v286, %v286
      %v357 = vmul.f32 %v291, %v291
      %v358 = vmul.f32 %v294, %v294
      %v359 = vadd.f32 %v351, %v352
      %v360 = vadd.f32 %v359, %v353
      %v361 = vadd.f32 %v360, %v354
      %v362 = vadd.f32 %v361, %v355
      %v363 = vadd.f32 %v362, %v356
      %v364 = vadd.f32 %v363, %v357
      %v365 = vadd.f32 %v364, %v358
      %v366 = vrot.slane %v365, 4
      %v367 = vadd.f32 %v365, %v366
      %v368 = vrot.slane %v367, 2
      %v369 = vadd.f32 %v367, %v368
      %v370 = vrot.slane %v369, 1
      %v371 = vadd.f32 %v369, %v370
      %372 = vst [vmem:[%s184 + $0x1] sm:$0x1] %v371
      %s373 = smul.u32 8, %s15
      %p374 = scmp.lt.s32.totalorder %s373, 15
      %s375 = scalar_select %p374, %s373, 15
      %s376 = smul.addr %s375, 4
      %s377 = scalar_lea.vmem %s2, %s376
      %p378 = scmp.lt.s32.totalorder %s15, 1
      %s379 = scalar_select %p378, %s15, 1
      %s380 = smul.addr %s379, 2
      %s381 = scalar_lea.vmem %s3, %s380
      // Predicated region
      $region29: #{basic_block_super_forward.5} parent=27 // pred_check
        %p382 = pneg %p80
      $region30: #{basic_block_super_forward.5} parent=27 // pred_check_branch
        %384 = sbr.rel (%p382) target = $region32
      $region31: #{basic_block_super_forward.5} parent=27 // pred_region
        %s385 = smul.u32 8, %s15
      $region32: #{basic_block_super_forward.5} parent=27 // pred_fallthru
        _
      // Predicated region
      $region33: #{basic_block_super_forward.5} parent=27 // pred_check
        %p386 = pneg %p106
      $region34: #{basic_block_super_forward.5} parent=27 // pred_check_branch
        %388 = sbr.rel (%p386) target = $region36
      $region35: #{basic_block_super_forward.5} parent=27 // pred_region
        _
      $region36: #{basic_block_super_forward.5} parent=27 // pred_fallthru
        _
    $region28: #{basic_block_super_forward.5} parent=5 // pred_fallthru
      _
    %p389 = scmp.le.s32.totalorder 2, %s10
    // Predicated region
    $region37: #{basic_block_super_forward.5} parent=5 // pred_check
      %p390 = pneg %p389
    $region38: #{basic_block_super_forward.5} parent=5 // pred_check_branch
      %392 = sbr.rel (%p390) target = $region40
    $region39: #{basic_block_super_forward.5} parent=5 // pred_region
      %s393 = ssub.s32 %s10, 2
      // Predicated region
      $region41: #{basic_block_super_forward.5} parent=39 // pred_check
        %p394 = pneg %p86
      $region42: #{basic_block_super_forward.5} parent=39 // pred_check_branch
        %396 = sbr.rel (%p394) target = $region44
      $region43: #{basic_block_super_forward.5} parent=39 // pred_region
        %s397 = smul.u32 8, %s16
        %p398 = scmp.lt.s32.totalorder %s397, 15
        %s399 = scalar_select %p398, %s397, 15
        %s400 = smul.addr %s399, 4
        %s401 = scalar_lea.vmem %s2, %s400
      $region44: #{basic_block_super_forward.5} parent=39 // pred_fallthru
        _
      // Predicated region
      $region45: #{basic_block_super_forward.5} parent=39 // pred_check
        %p402 = pneg %p112
      $region46: #{basic_block_super_forward.5} parent=39 // pred_check_branch
        %404 = sbr.rel (%p402) target = $region48
      $region47: #{basic_block_super_forward.5} parent=39 // pred_region
        %p405 = scmp.lt.s32.totalorder %s16, 1
        %s406 = scalar_select %p405, %s16, 1
        %s407 = smul.addr %s406, 2
        %s408 = scalar_lea.vmem %s3, %s407
      $region48: #{basic_block_super_forward.5} parent=39 // pred_fallthru
        _
    $region40: #{basic_block_super_forward.5} parent=5 // pred_fallthru
      _
  $region6: #{basic_block_super_forward.5} parent=0 // loop_footer
    %s14 = sadd.s32 1, %s10
  $region7: #{basic_block_super_forward.5} parent=0 // loop_footer_branch
    %9 = sbr.rel target = $region3
  $region8: #{basic_block_super_forward.5} parent=0 // loop_exit
    _

// kernel: basic_block_super_forward.6
$region0: #{basic_block_super_forward.6}
  #allocation0 [shape = 'u32[]', space=smem, size = 0x4, offset = 0x4, fixed_abs, tag = 'smem constant byte address 0x4 - core index']
  #allocation1 [shape = 'u32[144,128]{1,0:T(1,128)}', space=vmem, size = 0x12000, scoped, tag = 'internal scratch']
  %s0 = inlined_call_operand.vmem [shape: bf16[128,72], index: 0, kind: input, shape index: {}]
  %s1 = inlined_call_operand.vmem [shape: bf16[72,128], index: 1, kind: input, shape index: {}]
  %s2 = inlined_call_operand.vmem [shape: bf16[128,128], index: 2, kind: output, shape index: {0}]
  %s3 = inlined_call_operand.vmem [shape: f32[2,2,128], index: 3, kind: output, shape index: {1}]
  %4 = xla_tuple %s2, %s3
  %s5 = sld [smem:[#allocation0]]
  $region49: #{basic_block_super_forward.6} parent=0
    _
  %s7 = ssub.s32 1, %s5
  %s8 = scalar_select 0, %s7, %s5
  loop: start=0, step=1, limit=4
  $region2: #{basic_block_super_forward.6} parent=0 // loop_pre_header
    _
  $region3: #{basic_block_super_forward.6} parent=0 // loop_header
    %s10 = sphi 0, %s14
    %p11 = scmp.ge.s32.totalorder %s10, 4
    %s20 = sphi 0, %s22
    %s23 = sphi 0, %s20
    %s24 = sphi 0, %s23
    %s40 = sphi 0, %s24
    %s44 = sphi 0, %s44
    %s46 = sphi 0, %s44
    %s47 = sphi 0, %s46
    %s61 = sphi 0, %s47
    %s67 = sphi 0, %s69
    %s70 = sphi 0, %s67
    %s71 = sphi 0, %s70
    %s87 = sphi 0, %s71
    %s93 = sphi 0, %s95
    %s96 = sphi 0, %s93
    %s97 = sphi 0, %s96
    %s113 = sphi 0, %s97
  $region4: #{basic_block_super_forward.6} parent=0 // loop_header_branch
    %13 = sbr.rel (%p11) target = $region8
  $region5: #{basic_block_super_forward.6} parent=0 // loop_body
    %s15 = ssub.s32 %s10, 1
    %s16 = ssub.s32 %s10, 2
    %s17 = sadd.s32 %s10, 1
    %s18 = ssub.s32 %s10, %s17
    %p19 = scmp.eq.s32.totalorder %s18, 0
    %s21 = sadd.s32 %s20, 1
    %s22 = scalar_select %p19, %s20, %s21
    %p25 = pneg %p19
    %p26 = scmp.eq.s32.totalorder %s10, 1
    %p27 = por %p25, %p26
    %p28 = scmp.ne.s32.totalorder %s20, %s23
    %p29 = scmp.eq.s32.totalorder %s10, 0
    %p30 = por %p28, %p29
    %p31 = scmp.ne.s32.totalorder %s20, %s23
    %p32 = scmp.eq.s32.totalorder %s15, 1
    %p33 = por %p31, %p32
    %p34 = scmp.ne.s32.totalorder %s23, %s24
    %p35 = scmp.eq.s32.totalorder %s15, 0
    %p36 = por %p34, %p35
    %p37 = scmp.ne.s32.totalorder %s23, %s24
    %p38 = scmp.eq.s32.totalorder %s16, 1
    %p39 = por %p37, %p38
    %p41 = scmp.ne.s32.totalorder %s24, %s40
    %p42 = scmp.eq.s32.totalorder %s16, 0
    %p43 = por %p41, %p42
    %s45 = sadd.s32 %s44, 1
    %p48 = scmp.eq.s32.totalorder %s10, 1
    %p49 = scmp.ne.s32.totalorder %s44, %s46
    %p50 = scmp.eq.s32.totalorder %s10, 0
    %p51 = por %p49, %p50
    %p52 = scmp.ne.s32.totalorder %s44, %s46
    %p53 = scmp.eq.s32.totalorder %s15, 1
    %p54 = por %p52, %p53
    %p55 = scmp.ne.s32.totalorder %s46, %s47
    %p56 = scmp.eq.s32.totalorder %s15, 0
    %p57 = por %p55, %p56
    %p58 = scmp.ne.s32.totalorder %s46, %s47
    %p59 = scmp.eq.s32.totalorder %s16, 1
    %p60 = por %p58, %p59
    %p62 = scmp.ne.s32.totalorder %s47, %s61
    %p63 = scmp.eq.s32.totalorder %s16, 0
    %p64 = por %p62, %p63
    %s65 = ssub.s32 %s10, %s17
    %p66 = scmp.eq.s32.totalorder %s65, 0
    %s68 = sadd.s32 %s67, 1
    %s69 = scalar_select %p66, %s67, %s68
    %p72 = pneg %p66
    %p73 = scmp.eq.s32.totalorder %s10, 1
    %p74 = por %p72, %p73
    %p75 = scmp.ne.s32.totalorder %s67, %s70
    %p76 = scmp.eq.s32.totalorder %s10, 0
    %p77 = por %p75, %p76
    %p78 = scmp.ne.s32.totalorder %s67, %s70
    %p79 = scmp.eq.s32.totalorder %s15, 1
    %p80 = por %p78, %p79
    %p81 = scmp.ne.s32.totalorder %s70, %s71
    %p82 = scmp.eq.s32.totalorder %s15, 0
    %p83 = por %p81, %p82
    %p84 = scmp.ne.s32.totalorder %s70, %s71
    %p85 = scmp.eq.s32.totalorder %s16, 1
    %p86 = por %p84, %p85
    %p88 = scmp.ne.s32.totalorder %s71, %s87
    %p89 = scmp.eq.s32.totalorder %s16, 0
    %p90 = por %p88, %p89
    %s91 = ssub.s32 %s10, %s17
    %p92 = scmp.eq.s32.totalorder %s91, 0
    %s94 = sadd.s32 %s93, 1
    %s95 = scalar_select %p92, %s93, %s94
    %p98 = pneg %p92
    %p99 = scmp.eq.s32.totalorder %s10, 1
    %p100 = por %p98, %p99
    %p101 = scmp.ne.s32.totalorder %s93, %s96
    %p102 = scmp.eq.s32.totalorder %s10, 0
    %p103 = por %p101, %p102
    %p104 = scmp.ne.s32.totalorder %s93, %s96
    %p105 = scmp.eq.s32.totalorder %s15, 1
    %p106 = por %p104, %p105
    %p107 = scmp.ne.s32.totalorder %s96, %s97
    %p108 = scmp.eq.s32.totalorder %s15, 0
    %p109 = por %p107, %p108
    %p110 = scmp.ne.s32.totalorder %s96, %s97
    %p111 = scmp.eq.s32.totalorder %s16, 1
    %p112 = por %p110, %p111
    %p114 = scmp.ne.s32.totalorder %s97, %s113
    %p115 = scmp.eq.s32.totalorder %s16, 0
    %p116 = por %p114, %p115
    %p117 = scmp.le.s32.totalorder 1, %s10
    %p118 = scmp.lt.s32.totalorder %s10, 3
    %p119 = pnand %p117, %p118
    %p120 = pneg %p119
    // Predicated region
    $region9: #{basic_block_super_forward.6} parent=5 // pred_check
      _
    $region10: #{basic_block_super_forward.6} parent=5 // pred_check_branch
      %122 = sbr.rel (%p119) target = $region12
    $region11: #{basic_block_super_forward.6} parent=5 // pred_region
      %s123 = ssub.s32 %s10, 1
      // Predicated region
      $region13: #{basic_block_super_forward.6} parent=11 // pred_check
        %p124 = pneg %p57
      $region14: #{basic_block_super_forward.6} parent=11 // pred_check_branch
        %126 = sbr.rel (%p124) target = $region16
      $region15: #{basic_block_super_forward.6} parent=11 // pred_region
        _
      $region16: #{basic_block_super_forward.6} parent=11 // pred_fallthru
        _
    $region12: #{basic_block_super_forward.6} parent=5 // pred_fallthru
      _
    %p127 = scmp.lt.s32.totalorder %s10, 2
    // Predicated region
    $region17: #{basic_block_super_forward.6} parent=5 // pred_check
      %p128 = pneg %p127
    $region18: #{basic_block_super_forward.6} parent=5 // pred_check_branch
      %130 = sbr.rel (%p128) target = $region20
    $region19: #{basic_block_super_forward.6} parent=5 // pred_region
      // Predicated region
      $region21: #{basic_block_super_forward.6} parent=19 // pred_check
        %p131 = pneg %p30
      $region22: #{basic_block_super_forward.6} parent=19 // pred_check_branch
        %133 = sbr.rel (%p131) target = $region24
      $region23: #{basic_block_super_forward.6} parent=19 // pred_region
        %s134 = smul.u32 8, %s10
        %p135 = scmp.lt.s32.totalorder %s134, 15
        %s136 = scalar_select %p135, %s134, 15
        %s137 = smul.addr %s136, 4
        %s138 = scalar_lea.vmem %s0, %s137
        %s139 = smul.u32 8, %s10
      $region24: #{basic_block_super_forward.6} parent=19 // pred_fallthru
        _
    $region20: #{basic_block_super_forward.6} parent=5 // pred_fallthru
      _
    %p140 = scmp.le.s32.totalorder 1, %s10
    %p141 = scmp.lt.s32.totalorder %s10, 3
    %p142 = pnand %p140, %p141
    %p143 = pneg %p142
    // Predicated region
    $region25: #{basic_block_super_forward.6} parent=5 // pred_check
      _
    $region26: #{basic_block_super_forward.6} parent=5 // pred_check_branch
      %145 = sbr.rel (%p142) target = $region28
    $region27: #{basic_block_super_forward.6} parent=5 // pred_region
      %s146 = ssub.s32 %s10, 1
      %s147 = smul.u32 8, %s15
      %p148 = scmp.lt.s32.totalorder %s147, 15
      %s149 = scalar_select %p148, %s147, 15
      %s150 = smul.addr %s149, 4
      %s151 = scalar_lea.vmem %s0, %s150
      %p152 = pneg %p36
      %p153 = pneg %p33
      %p154 = pneg %p57
      %p155 = pneg %p54
      %p156 = pneg %p83
      %p157 = pneg %p80
      %s158 = smul.u32 8, %s15
      %p159 = scmp.lt.s32.totalorder %s158, 15
      %s160 = scalar_select %p159, %s158, 15
      %s161 = smul.addr %s160, 4
      %s162 = scalar_lea.vmem %s2, %s161
      %p163 = pneg %p109
      %p164 = pneg %p106
      %p165 = scmp.lt.s32.totalorder %s15, 1
      %s166 = scalar_select %p165, %s15, 1
      %s167 = smul.addr %s166, 2
      %s168 = scalar_lea.vmem %s3, %s167
      %s169 = smul.u32 8, %s15
      %p170 = scmp.lt.s32.totalorder %s169, 15
      %s171 = scalar_select %p170, %s169, 15
      %s172 = smul.addr %s171, 4
      %s173 = scalar_lea.vmem %s0, %s172
      %s174 = smul.u32 8, %s15
      %s175 = smul.u32 8, %s15
      %p176 = scmp.lt.s32.totalorder %s175, 15
      %s177 = scalar_select %p176, %s175, 15
      %s178 = smul.addr %s177, 4
      %s179 = scalar_lea.vmem %s2, %s178
      %s180 = smul.u32 8, %s15
      %p181 = scmp.lt.s32.totalorder %s15, 1
      %s182 = scalar_select %p181, %s15, 1
      %s183 = smul.addr %s182, 2
      %s184 = scalar_lea.vmem %s3, %s183
      %v186 = vld [vmem:[%s173] sm:$0xf]
      %v187 = vld [vmem:[%s173 + $0x4] sm:$0xf]
      %v188 = vld [vmem:[%s173 + $0x8] sm:$0xf]
      %v189 = vld [vmem:[%s173 + $0xc] sm:$0xf]
      %v190 = vld [vmem:[%s173 + $0x10] sm:$0xf]
      %v191 = vld [vmem:[%s173 + $0x14] sm:$0xf]
      %v192 = vld [vmem:[%s173 + $0x18] sm:$0xf]
      %v193 = vld [vmem:[%s173 + $0x1c] sm:$0xf]
      %v194 = vld [vmem:[%s1] sm:$0xf]
      %v195 = vld [vmem:[%s1 + $0x4] sm:$0xf]
      %v196 = vld [vmem:[%s1 + $0x8] sm:$0xf]
      %v197 = vld [vmem:[%s1 + $0xc] sm:$0xf]
      %v198 = vld [vmem:[%s1 + $0x10] sm:$0xf]
      %v199 = vld [vmem:[%s1 + $0x14] sm:$0xf]
      %v200 = vld [vmem:[%s1 + $0x18] sm:$0xf]
      %v201 = vld [vmem:[%s1 + $0x1c] sm:$0xf]
      %v202 = vld [vmem:[%s1 + $0x20] sm:$0xf]
      %v211 = vunpack.c.l.b16 %v186
      %v212 = vunpack.c.l.b16 %v187
      %v213 = vunpack.c.l.b16 %v188
      %v214 = vunpack.c.l.b16 %v189
      %v215 = vunpack.c.l.b16 %v190
      %v216 = vunpack.c.l.b16 %v191
      %v217 = vunpack.c.l.b16 %v192
      %v218 = vunpack.c.l.b16 %v193
      %v219 = vpack.c.b16 %v212, %v211
      %v220 = vpack.c.b16 %v214, %v213
      %v221 = vpack.c.b16 %v216, %v215
      %v222 = vpack.c.b16 %v218, %v217
      %v232 = vunpack.c.l.b16 %v194
      %v233 = vunpack.c.l.b16 %v195
      %v234 = vunpack.c.l.b16 %v196
      %v235 = vunpack.c.l.b16 %v197
      %v236 = vunpack.c.l.b16 %v198
      %v237 = vunpack.c.l.b16 %v199
      %v238 = vunpack.c.l.b16 %v200
      %v239 = vunpack.c.l.b16 %v201
      %v240 = vunpack.c.l.b16 %v202
      %v241 = vpack.c.b16 %v233, %v232
      %v242 = vpack.c.b16 %v235, %v234
      %v243 = vpack.c.b16 %v237, %v236
      %v244 = vpack.c.b16 %v239, %v238
      %v245 = vpack.c.b16 %v240, %v240
      %vm250 = vcmask 588800
      %v252 = vsel %vm250, %v219, 0
      %v255 = vsel %vm250, %v220, 0
      %v258 = vsel %vm250, %v221, 0
      %v261 = vsel %vm250, %v222, 0
      %vm263 = vcmask 1043456
      %v265 = vsel %vm263, %v245, 0
      %267 = vmatprep.subr.bf16.mxu0 0
      %268 = vmatpush1.bf16.msra.mxu0 %v241
      %269 = vmatprep.subr.bf16.mxu0 0
      %270 = vmatpush1.bf16.msra.mxu0 %v242
      %271 = vmatprep.subr.bf16.mxu0 0
      %272 = vmatpush1.bf16.msra.mxu0 %v243
      %273 = vmatprep.subr.bf16.mxu0 0
      %274 = vmatpush1.bf16.msra.mxu0 %v244
      %275 = vmatprep.subr.bf16.mxu0 0
      %276 = vmatpush1.bf16.msra.mxu0 %v265
      %277 = vmatprep.subr.bf16.mxu0 0
      %278 = vmatpush1.bf16.msra.mxu0 0
      %279 = vmatprep.subr.bf16.mxu0 0
      %280 = vmatpush1.bf16.msra.mxu0 0
      %281 = vmatprep.subr.bf16.mxu0 0
      %282 = vmatpush1.bf16.msra.mxu0 0
      %283 = vmatprep.subr.bf16.mxu0 0
      %284 = vmatpush1.bf16.msra.mxu0 0
      %285 = vmatprep.subr.bf16.mxu0 0
      %286 = vmatpush1.bf16.msra.mxu0 0
      %287 = vmatprep.subr.bf16.mxu0 0
      %288 = vmatpush1.bf16.msra.mxu0 0
      %289 = vmatprep.subr.bf16.mxu0 0
      %290 = vmatpush1.bf16.msra.mxu0 0
      %291 = vmatprep.subr.bf16.mxu0 0
      %292 = vmatpush1.bf16.msra.mxu0 0
      %293 = vmatprep.subr.bf16.mxu0 0
      %294 = vmatpush1.bf16.msra.mxu0 0
      %295 = vmatprep.subr.bf16.mxu0 0
      %296 = vmatpush1.bf16.msra.mxu0 0
      %297 = vmatprep.subr.bf16.mxu0 0
      %298 = vmatpush1.bf16.msra.mxu0 0
      %299 = vmatprep.mubr.bf16.mxu0 0
      %300 = vmatmul.mubr.bf16.gmra.mrb[0].mxu0 %v252
      %v301 = vpop.f32.mrb[0].mxu0
      %v302 = vadd.f32 0.0, %v301
      %v303 = vpop.f32.mrb[0].mxu0
      %v304 = vpop.f32.mrb[0].mxu0
      %v305 = vadd.f32 0.0, %v304
      %v306 = vpop.f32.mrb[0].mxu0
      %307 = vmatprep.mubr.bf16.mxu0 0
      %308 = vmatmul.mubr.bf16.gmra.mrb[0].mxu0 %v255
      %v309 = vpop.f32.mrb[0].mxu0
      %v310 = vadd.f32 0.0, %v309
      %v311 = vpop.f32.mrb[0].mxu0
      %v312 = vpop.f32.mrb[0].mxu0
      %v313 = vadd.f32 0.0, %v312
      %v314 = vpop.f32.mrb[0].mxu0
      %315 = vmatprep.mubr.bf16.mxu0 0
      %316 = vmatmul.mubr.bf16.gmra.mrb[0].mxu0 %v258
      %v317 = vpop.f32.mrb[0].mxu0
      %v318 = vadd.f32 0.0, %v317
      %v319 = vpop.f32.mrb[0].mxu0
      %v320 = vpop.f32.mrb[0].mxu0
      %v321 = vadd.f32 0.0, %v320
      %v322 = vpop.f32.mrb[0].mxu0
      %323 = vmatprep.mubr.bf16.mxu0 0
      %324 = vmatmul.mubr.bf16.gmra.mrb[0].mxu0 %v261
      %v325 = vpop.f32.mrb[0].mxu0
      %v326 = vadd.f32 0.0, %v325
      %v327 = vpop.f32.mrb[0].mxu0
      %v328 = vpop.f32.mrb[0].mxu0
      %v329 = vadd.f32 0.0, %v328
      %v330 = vpop.f32.mrb[0].mxu0
      %331 = vdwg.mxu0
      %v332 = vpack.c.bf16 %v305, %v302
      %v333 = vpack.c.bf16 %v313, %v310
      %v334 = vpack.c.bf16 %v321, %v318
      %v335 = vpack.c.bf16 %v329, %v326
      %v340 = vunpack.c.l.b16 %v332
      %v341 = vunpack.c.h.b16 %v332
      %v342 = vunpack.c.l.b16 %v333
      %v343 = vunpack.c.h.b16 %v333
      %v344 = vunpack.c.l.b16 %v334
      %v345 = vunpack.c.h.b16 %v334
      %v346 = vunpack.c.l.b16 %v335
      %v347 = vunpack.c.h.b16 %v335
      %v348 = vpack.c.b16 %v340, %v340
      %v349 = vpack.c.b16 %v341, %v341
      %v350 = vpack.c.b16 %v342, %v342
      %v351 = vpack.c.b16 %v343, %v343
      %v352 = vpack.c.b16 %v344, %v344
      %v353 = vpack.c.b16 %v345, %v345
      %v354 = vpack.c.b16 %v346, %v346
      %v355 = vpack.c.b16 %v347, %v347
      %364 = vst [vmem:[%s179] sm:$0xf] %v348
      %365 = vst [vmem:[%s179 + $0x4] sm:$0xf] %v349
      %366 = vst [vmem:[%s179 + $0x8] sm:$0xf] %v350
      %367 = vst [vmem:[%s179 + $0xc] sm:$0xf] %v351
      %368 = vst [vmem:[%s179 + $0x10] sm:$0xf] %v352
      %369 = vst [vmem:[%s179 + $0x14] sm:$0xf] %v353
      %370 = vst [vmem:[%s179 + $0x18] sm:$0xf] %v354
      %371 = vst [vmem:[%s179 + $0x1c] sm:$0xf] %v355
      %v372 = vadd.f32 %v302, %v305
      %v373 = vadd.f32 %v372, %v310
      %v374 = vadd.f32 %v373, %v313
      %v375 = vadd.f32 %v374, %v318
      %v376 = vadd.f32 %v375, %v321
      %v377 = vadd.f32 %v376, %v326
      %v378 = vadd.f32 %v377, %v329
      %v379 = vrot.slane %v378, 4
      %v380 = vadd.f32 %v378, %v379
      %v381 = vrot.slane %v380, 2
      %v382 = vadd.f32 %v380, %v381
      %v383 = vrot.slane %v382, 1
      %v384 = vadd.f32 %v382, %v383
      %385 = vst [vmem:[%s184] sm:$0x1] %v384
      %v386 = vmul.f32 %v302, %v302
      %v387 = vmul.f32 %v305, %v305
      %v388 = vmul.f32 %v310, %v310
      %v389 = vmul.f32 %v313, %v313
      %v390 = vmul.f32 %v318, %v318
      %v391 = vmul.f32 %v321, %v321
      %v392 = vmul.f32 %v326, %v326
      %v393 = vmul.f32 %v329, %v329
      %v394 = vadd.f32 %v386, %v387
      %v395 = vadd.f32 %v394, %v388
      %v396 = vadd.f32 %v395, %v389
      %v397 = vadd.f32 %v396, %v390
      %v398 = vadd.f32 %v397, %v391
      %v399 = vadd.f32 %v398, %v392
      %v400 = vadd.f32 %v399, %v393
      %v401 = vrot.slane %v400, 4
      %v402 = vadd.f32 %v400, %v401
      %v403 = vrot.slane %v402, 2
      %v404 = vadd.f32 %v402, %v403
      %v405 = vrot.slane %v404, 1
      %v406 = vadd.f32 %v404, %v405
      %407 = vst [vmem:[%s184 + $0x1] sm:$0x1] %v406
      %s408 = smul.u32 8, %s15
      %p409 = scmp.lt.s32.totalorder %s408, 15
      %s410 = scalar_select %p409, %s408, 15
      %s411 = smul.addr %s410, 4
      %s412 = scalar_lea.vmem %s2, %s411
      %p413 = scmp.lt.s32.totalorder %s15, 1
      %s414 = scalar_select %p413, %s15, 1
      %s415 = smul.addr %s414, 2
      %s416 = scalar_lea.vmem %s3, %s415
      // Predicated region
      $region29: #{basic_block_super_forward.6} parent=27 // pred_check
        %p417 = pneg %p80
      $region30: #{basic_block_super_forward.6} parent=27 // pred_check_branch
        %419 = sbr.rel (%p417) target = $region32
      $region31: #{basic_block_super_forward.6} parent=27 // pred_region
        %s420 = smul.u32 8, %s15
      $region32: #{basic_block_super_forward.6} parent=27 // pred_fallthru
        _
      // Predicated region
      $region33: #{basic_block_super_forward.6} parent=27 // pred_check
        %p421 = pneg %p106
      $region34: #{basic_block_super_forward.6} parent=27 // pred_check_branch
        %423 = sbr.rel (%p421) target = $region36
      $region35: #{basic_block_super_forward.6} parent=27 // pred_region
        _
      $region36: #{basic_block_super_forward.6} parent=27 // pred_fallthru
        _
    $region28: #{basic_block_super_forward.6} parent=5 // pred_fallthru
      _
    %p424 = scmp.le.s32.totalorder 2, %s10
    // Predicated region
    $region37: #{basic_block_super_forward.6} parent=5 // pred_check
      %p425 = pneg %p424
    $region38: #{basic_block_super_forward.6} parent=5 // pred_check_branch
      %427 = sbr.rel (%p425) target = $region40
    $region39: #{basic_block_super_forward.6} parent=5 // pred_region
      %s428 = ssub.s32 %s10, 2
      // Predicated region
      $region41: #{basic_block_super_forward.6} parent=39 // pred_check
        %p429 = pneg %p86
      $region42: #{basic_block_super_forward.6} parent=39 // pred_check_branch
        %431 = sbr.rel (%p429) target = $region44
      $region43: #{basic_block_super_forward.6} parent=39 // pred_region
        %s432 = smul.u32 8, %s16
        %p433 = scmp.lt.s32.totalorder %s432, 15
        %s434 = scalar_select %p433, %s432, 15
        %s435 = smul.addr %s434, 4
        %s436 = scalar_lea.vmem %s2, %s435
      $region44: #{basic_block_super_forward.6} parent=39 // pred_fallthru
        _
      // Predicated region
      $region45: #{basic_block_super_forward.6} parent=39 // pred_check
        %p437 = pneg %p112
      $region46: #{basic_block_super_forward.6} parent=39 // pred_check_branch
        %439 = sbr.rel (%p437) target = $region48
      $region47: #{basic_block_super_forward.6} parent=39 // pred_region
        %p440 = scmp.lt.s32.totalorder %s16, 1
        %s441 = scalar_select %p440, %s16, 1
        %s442 = smul.addr %s441, 2
        %s443 = scalar_lea.vmem %s3, %s442
      $region48: #{basic_block_super_forward.6} parent=39 // pred_fallthru
        _
    $region40: #{basic_block_super_forward.6} parent=5 // pred_fallthru
      _
  $region6: #{basic_block_super_forward.6} parent=0 // loop_footer
    %s14 = sadd.s32 1, %s10
  $region7: #{basic_block_super_forward.6} parent=0 // loop_footer_branch
    %9 = sbr.rel target = $region3
  $region8: #{basic_block_super_forward.6} parent=0 // loop_exit
    _

// kernel: basic_block_super_forward.7
$region0: #{basic_block_super_forward.7}
  #allocation0 [shape = 'u32[]', space=smem, size = 0x4, offset = 0x4, fixed_abs, tag = 'smem constant byte address 0x4 - core index']
  #allocation1 [shape = 'u32[144,128]{1,0:T(1,128)}', space=vmem, size = 0x12000, scoped, tag = 'internal scratch']
  %s0 = inlined_call_operand.vmem [shape: bf16[128,128], index: 0, kind: input, shape index: {}]
  %s1 = inlined_call_operand.vmem [shape: f32[1,128], index: 1, kind: input, shape index: {}]
  %s2 = inlined_call_operand.vmem [shape: f32[1,128], index: 2, kind: input, shape index: {}]
  %s3 = inlined_call_operand.vmem [shape: bf16[128,128], index: 3, kind: input, shape index: {}]
  %s4 = inlined_call_operand.vmem [shape: f32[1,128], index: 4, kind: input, shape index: {}]
  %s5 = inlined_call_operand.vmem [shape: f32[1,128], index: 5, kind: input, shape index: {}]
  %s6 = inlined_call_operand.vmem [shape: f32[128,128], index: 6, kind: output, shape index: {}]
  %s7 = sld [smem:[#allocation0]]
  $region57: #{basic_block_super_forward.7} parent=0
    _
  %s9 = ssub.s32 1, %s7
  %s10 = scalar_select 0, %s9, %s7
  loop: start=0, step=1, limit=4
  $region2: #{basic_block_super_forward.7} parent=0 // loop_pre_header
    _
  $region3: #{basic_block_super_forward.7} parent=0 // loop_header
    %s12 = sphi 0, %s16
    %p13 = scmp.ge.s32.totalorder %s12, 4
    %s22 = sphi 0, %s24
    %s25 = sphi 0, %s22
    %s26 = sphi 0, %s25
    %s42 = sphi 0, %s26
    %s46 = sphi 0, %s46
    %s48 = sphi 0, %s46
    %s49 = sphi 0, %s48
    %s63 = sphi 0, %s49
    %s67 = sphi 0, %s67
    %s69 = sphi 0, %s67
    %s70 = sphi 0, %s69
    %s84 = sphi 0, %s70
    %s90 = sphi 0, %s92
    %s93 = sphi 0, %s90
    %s94 = sphi 0, %s93
    %s110 = sphi 0, %s94
    %s114 = sphi 0, %s114
    %s116 = sphi 0, %s114
    %s117 = sphi 0, %s116
    %s131 = sphi 0, %s117
    %s135 = sphi 0, %s135
    %s137 = sphi 0, %s135
    %s138 = sphi 0, %s137
    %s152 = sphi 0, %s138
    %s158 = sphi 0, %s160
    %s161 = sphi 0, %s158
    %s162 = sphi 0, %s161
    %s178 = sphi 0, %s162
  $region4: #{basic_block_super_forward.7} parent=0 // loop_header_branch
    %15 = sbr.rel (%p13) target = $region8
  $region5: #{basic_block_super_forward.7} parent=0 // loop_body
    %s17 = ssub.s32 %s12, 1
    %s18 = ssub.s32 %s12, 2
    %s19 = sadd.s32 %s12, 1
    %s20 = ssub.s32 %s12, %s19
    %p21 = scmp.eq.s32.totalorder %s20, 0
    %s23 = sadd.s32 %s22, 1
    %s24 = scalar_select %p21, %s22, %s23
    %p27 = pneg %p21
    %p28 = scmp.eq.s32.totalorder %s12, 1
    %p29 = por %p27, %p28
    %p30 = scmp.ne.s32.totalorder %s22, %s25
    %p31 = scmp.eq.s32.totalorder %s12, 0
    %p32 = por %p30, %p31
    %p33 = scmp.ne.s32.totalorder %s22, %s25
    %p34 = scmp.eq.s32.totalorder %s17, 1
    %p35 = por %p33, %p34
    %p36 = scmp.ne.s32.totalorder %s25, %s26
    %p37 = scmp.eq.s32.totalorder %s17, 0
    %p38 = por %p36, %p37
    %p39 = scmp.ne.s32.totalorder %s25, %s26
    %p40 = scmp.eq.s32.totalorder %s18, 1
    %p41 = por %p39, %p40
    %p43 = scmp.ne.s32.totalorder %s26, %s42
    %p44 = scmp.eq.s32.totalorder %s18, 0
    %p45 = por %p43, %p44
    %s47 = sadd.s32 %s46, 1
    %p50 = scmp.eq.s32.totalorder %s12, 1
    %p51 = scmp.ne.s32.totalorder %s46, %s48
    %p52 = scmp.eq.s32.totalorder %s12, 0
    %p53 = por %p51, %p52
    %p54 = scmp.ne.s32.totalorder %s46, %s48
    %p55 = scmp.eq.s32.totalorder %s17, 1
    %p56 = por %p54, %p55
    %p57 = scmp.ne.s32.totalorder %s48, %s49
    %p58 = scmp.eq.s32.totalorder %s17, 0
    %p59 = por %p57, %p58
    %p60 = scmp.ne.s32.totalorder %s48, %s49
    %p61 = scmp.eq.s32.totalorder %s18, 1
    %p62 = por %p60, %p61
    %p64 = scmp.ne.s32.totalorder %s49, %s63
    %p65 = scmp.eq.s32.totalorder %s18, 0
    %p66 = por %p64, %p65
    %s68 = sadd.s32 %s67, 1
    %p71 = scmp.eq.s32.totalorder %s12, 1
    %p72 = scmp.ne.s32.totalorder %s67, %s69
    %p73 = scmp.eq.s32.totalorder %s12, 0
    %p74 = por %p72, %p73
    %p75 = scmp.ne.s32.totalorder %s67, %s69
    %p76 = scmp.eq.s32.totalorder %s17, 1
    %p77 = por %p75, %p76
    %p78 = scmp.ne.s32.totalorder %s69, %s70
    %p79 = scmp.eq.s32.totalorder %s17, 0
    %p80 = por %p78, %p79
    %p81 = scmp.ne.s32.totalorder %s69, %s70
    %p82 = scmp.eq.s32.totalorder %s18, 1
    %p83 = por %p81, %p82
    %p85 = scmp.ne.s32.totalorder %s70, %s84
    %p86 = scmp.eq.s32.totalorder %s18, 0
    %p87 = por %p85, %p86
    %s88 = ssub.s32 %s12, %s19
    %p89 = scmp.eq.s32.totalorder %s88, 0
    %s91 = sadd.s32 %s90, 1
    %s92 = scalar_select %p89, %s90, %s91
    %p95 = pneg %p89
    %p96 = scmp.eq.s32.totalorder %s12, 1
    %p97 = por %p95, %p96
    %p98 = scmp.ne.s32.totalorder %s90, %s93
    %p99 = scmp.eq.s32.totalorder %s12, 0
    %p100 = por %p98, %p99
    %p101 = scmp.ne.s32.totalorder %s90, %s93
    %p102 = scmp.eq.s32.totalorder %s17, 1
    %p103 = por %p101, %p102
    %p104 = scmp.ne.s32.totalorder %s93, %s94
    %p105 = scmp.eq.s32.totalorder %s17, 0
    %p106 = por %p104, %p105
    %p107 = scmp.ne.s32.totalorder %s93, %s94
    %p108 = scmp.eq.s32.totalorder %s18, 1
    %p109 = por %p107, %p108
    %p111 = scmp.ne.s32.totalorder %s94, %s110
    %p112 = scmp.eq.s32.totalorder %s18, 0
    %p113 = por %p111, %p112
    %s115 = sadd.s32 %s114, 1
    %p118 = scmp.eq.s32.totalorder %s12, 1
    %p119 = scmp.ne.s32.totalorder %s114, %s116
    %p120 = scmp.eq.s32.totalorder %s12, 0
    %p121 = por %p119, %p120
    %p122 = scmp.ne.s32.totalorder %s114, %s116
    %p123 = scmp.eq.s32.totalorder %s17, 1
    %p124 = por %p122, %p123
    %p125 = scmp.ne.s32.totalorder %s116, %s117
    %p126 = scmp.eq.s32.totalorder %s17, 0
    %p127 = por %p125, %p126
    %p128 = scmp.ne.s32.totalorder %s116, %s117
    %p129 = scmp.eq.s32.totalorder %s18, 1
    %p130 = por %p128, %p129
    %p132 = scmp.ne.s32.totalorder %s117, %s131
    %p133 = scmp.eq.s32.totalorder %s18, 0
    %p134 = por %p132, %p133
    %s136 = sadd.s32 %s135, 1
    %p139 = scmp.eq.s32.totalorder %s12, 1
    %p140 = scmp.ne.s32.totalorder %s135, %s137
    %p141 = scmp.eq.s32.totalorder %s12, 0
    %p142 = por %p140, %p141
    %p143 = scmp.ne.s32.totalorder %s135, %s137
    %p144 = scmp.eq.s32.totalorder %s17, 1
    %p145 = por %p143, %p144
    %p146 = scmp.ne.s32.totalorder %s137, %s138
    %p147 = scmp.eq.s32.totalorder %s17, 0
    %p148 = por %p146, %p147
    %p149 = scmp.ne.s32.totalorder %s137, %s138
    %p150 = scmp.eq.s32.totalorder %s18, 1
    %p151 = por %p149, %p150
    %p153 = scmp.ne.s32.totalorder %s138, %s152
    %p154 = scmp.eq.s32.totalorder %s18, 0
    %p155 = por %p153, %p154
    %s156 = ssub.s32 %s12, %s19
    %p157 = scmp.eq.s32.totalorder %s156, 0
    %s159 = sadd.s32 %s158, 1
    %s160 = scalar_select %p157, %s158, %s159
    %p163 = pneg %p157
    %p164 = scmp.eq.s32.totalorder %s12, 1
    %p165 = por %p163, %p164
    %p166 = scmp.ne.s32.totalorder %s158, %s161
    %p167 = scmp.eq.s32.totalorder %s12, 0
    %p168 = por %p166, %p167
    %p169 = scmp.ne.s32.totalorder %s158, %s161
    %p170 = scmp.eq.s32.totalorder %s17, 1
    %p171 = por %p169, %p170
    %p172 = scmp.ne.s32.totalorder %s161, %s162
    %p173 = scmp.eq.s32.totalorder %s17, 0
    %p174 = por %p172, %p173
    %p175 = scmp.ne.s32.totalorder %s161, %s162
    %p176 = scmp.eq.s32.totalorder %s18, 1
    %p177 = por %p175, %p176
    %p179 = scmp.ne.s32.totalorder %s162, %s178
    %p180 = scmp.eq.s32.totalorder %s18, 0
    %p181 = por %p179, %p180
    %p182 = scmp.le.s32.totalorder 1, %s12
    %p183 = scmp.lt.s32.totalorder %s12, 3
    %p184 = pnand %p182, %p183
    %p185 = pneg %p184
    // Predicated region
    $region9: #{basic_block_super_forward.7} parent=5 // pred_check
      _
    $region10: #{basic_block_super_forward.7} parent=5 // pred_check_branch
      %187 = sbr.rel (%p184) target = $region12
    $region11: #{basic_block_super_forward.7} parent=5 // pred_region
      %s188 = ssub.s32 %s12, 1
      // Predicated region
      $region13: #{basic_block_super_forward.7} parent=11 // pred_check
        %p189 = pneg %p59
      $region14: #{basic_block_super_forward.7} parent=11 // pred_check_branch
        %191 = sbr.rel (%p189) target = $region16
      $region15: #{basic_block_super_forward.7} parent=11 // pred_region
        _
      $region16: #{basic_block_super_forward.7} parent=11 // pred_fallthru
        _
      // Predicated region
      $region17: #{basic_block_super_forward.7} parent=11 // pred_check
        %p192 = pneg %p80
      $region18: #{basic_block_super_forward.7} parent=11 // pred_check_branch
        %194 = sbr.rel (%p192) target = $region20
      $region19: #{basic_block_super_forward.7} parent=11 // pred_region
        _
      $region20: #{basic_block_super_forward.7} parent=11 // pred_fallthru
        _
      // Predicated region
      $region21: #{basic_block_super_forward.7} parent=11 // pred_check
        %p195 = pneg %p127
      $region22: #{basic_block_super_forward.7} parent=11 // pred_check_branch
        %197 = sbr.rel (%p195) target = $region24
      $region23: #{basic_block_super_forward.7} parent=11 // pred_region
        _
      $region24: #{basic_block_super_forward.7} parent=11 // pred_fallthru
        _
      // Predicated region
      $region25: #{basic_block_super_forward.7} parent=11 // pred_check
        %p198 = pneg %p148
      $region26: #{basic_block_super_forward.7} parent=11 // pred_check_branch
        %200 = sbr.rel (%p198) target = $region28
      $region27: #{basic_block_super_forward.7} parent=11 // pred_region
        _
      $region28: #{basic_block_super_forward.7} parent=11 // pred_fallthru
        _
    $region12: #{basic_block_super_forward.7} parent=5 // pred_fallthru
      _
    %p201 = scmp.lt.s32.totalorder %s12, 2
    // Predicated region
    $region29: #{basic_block_super_forward.7} parent=5 // pred_check
      %p202 = pneg %p201
    $region30: #{basic_block_super_forward.7} parent=5 // pred_check_branch
      %204 = sbr.rel (%p202) target = $region32
    $region31: #{basic_block_super_forward.7} parent=5 // pred_region
      // Predicated region
      $region33: #{basic_block_super_forward.7} parent=31 // pred_check
        %p205 = pneg %p32
      $region34: #{basic_block_super_forward.7} parent=31 // pred_check_branch
        %207 = sbr.rel (%p205) target = $region36
      $region35: #{basic_block_super_forward.7} parent=31 // pred_region
        %s208 = smul.u32 8, %s12
        %p209 = scmp.lt.s32.totalorder %s208, 15
        %s210 = scalar_select %p209, %s208, 15
        %s211 = smul.addr %s210, 4
        %s212 = scalar_lea.vmem %s0, %s211
        %s213 = smul.u32 8, %s12
      $region36: #{basic_block_super_forward.7} parent=31 // pred_fallthru
        _
      // Predicated region
      $region37: #{basic_block_super_forward.7} parent=31 // pred_check
        %p214 = pneg %p100
      $region38: #{basic_block_super_forward.7} parent=31 // pred_check_branch
        %216 = sbr.rel (%p214) target = $region40
      $region39: #{basic_block_super_forward.7} parent=31 // pred_region
        %s217 = smul.u32 8, %s12
        %p218 = scmp.lt.s32.totalorder %s217, 15
        %s219 = scalar_select %p218, %s217, 15
        %s220 = smul.addr %s219, 4
        %s221 = scalar_lea.vmem %s3, %s220
        %s222 = smul.u32 8, %s12
      $region40: #{basic_block_super_forward.7} parent=31 // pred_fallthru
        _
    $region32: #{basic_block_super_forward.7} parent=5 // pred_fallthru
      _
    %p223 = scmp.le.s32.totalorder 1, %s12
    %p224 = scmp.lt.s32.totalorder %s12, 3
    %p225 = pnand %p223, %p224
    %p226 = pneg %p225
    // Predicated region
    $region41: #{basic_block_super_forward.7} parent=5 // pred_check
      _
    $region42: #{basic_block_super_forward.7} parent=5 // pred_check_branch
      %228 = sbr.rel (%p225) target = $region44
    $region43: #{basic_block_super_forward.7} parent=5 // pred_region
      %s229 = ssub.s32 %s12, 1
      %s230 = smul.u32 8, %s17
      %p231 = scmp.lt.s32.totalorder %s230, 15
      %s232 = scalar_select %p231, %s230, 15
      %s233 = smul.addr %s232, 4
      %s234 = scalar_lea.vmem %s0, %s233
      %p235 = pneg %p38
      %p236 = pneg %p35
      %p237 = pneg %p59
      %p238 = pneg %p56
      %p239 = pneg %p80
      %p240 = pneg %p77
      %s241 = smul.u32 8, %s17
      %p242 = scmp.lt.s32.totalorder %s241, 15
      %s243 = scalar_select %p242, %s241, 15
      %s244 = smul.addr %s243, 4
      %s245 = scalar_lea.vmem %s3, %s244
      %p246 = pneg %p106
      %p247 = pneg %p103
      %p248 = pneg %p127
      %p249 = pneg %p124
      %p250 = pneg %p148
      %p251 = pneg %p145
      %p252 = pneg %p174
      %p253 = pneg %p171
      %s254 = smul.u32 8, %s17
      %p255 = scmp.lt.s32.totalorder %s254, 15
      %s256 = scalar_select %p255, %s254, 15
      %s257 = smul.addr %s256, 8
      %s258 = scalar_lea.vmem %s6, %s257
      %s259 = smul.u32 8, %s17
      %p260 = scmp.lt.s32.totalorder %s259, 15
      %s261 = scalar_select %p260, %s259, 15
      %s262 = smul.addr %s261, 4
      %s263 = scalar_lea.vmem %s0, %s262
      %s264 = smul.u32 8, %s17
      %s265 = smul.u32 8, %s17
      %p266 = scmp.lt.s32.totalorder %s265, 15
      %s267 = scalar_select %p266, %s265, 15
      %s268 = smul.addr %s267, 4
      %s269 = scalar_lea.vmem %s3, %s268
      %s270 = smul.u32 8, %s17
      %s271 = smul.u32 8, %s17
      %p272 = scmp.lt.s32.totalorder %s271, 15
      %s273 = scalar_select %p272, %s271, 15
      %s274 = smul.addr %s273, 8
      %s275 = scalar_lea.vmem %s6, %s274
      %s276 = smul.u32 8, %s17
      %v277 = vld [vmem:[%s263] sm:$0xf]
      %v278 = vld [vmem:[%s263 + $0x4] sm:$0xf]
      %v279 = vld [vmem:[%s263 + $0x8] sm:$0xf]
      %v280 = vld [vmem:[%s263 + $0xc] sm:$0xf]
      %v281 = vld [vmem:[%s263 + $0x10] sm:$0xf]
      %v282 = vld [vmem:[%s263 + $0x14] sm:$0xf]
      %v283 = vld [vmem:[%s263 + $0x18] sm:$0xf]
      %v284 = vld [vmem:[%s263 + $0x1c] sm:$0xf]
      %v285 = vunpack.c.l.bf16 %v277
      %v286 = vunpack.c.l.bf16 %v278
      %v287 = vunpack.c.l.bf16 %v279
      %v288 = vunpack.c.l.bf16 %v280
      %v289 = vunpack.c.l.bf16 %v281
      %v290 = vunpack.c.l.bf16 %v282
      %v291 = vunpack.c.l.bf16 %v283
      %v292 = vunpack.c.l.bf16 %v284
      %v293 = vld [vmem:[%s1] sm:$0x1]
      %v295 = vlaneseq
      %v296 = vshrl.u32 %v295, 7
      %v297 = vsub.s32 0, %v296
      %v298 = vrot.slane %v293, %v297
      %v300 = vmul.f32 %v285, %v298
      %v301 = vmul.f32 %v286, %v298
      %v302 = vmul.f32 %v287, %v298
      %v303 = vmul.f32 %v288, %v298
      %v304 = vmul.f32 %v289, %v298
      %v305 = vmul.f32 %v290, %v298
      %v306 = vmul.f32 %v291, %v298
      %v307 = vmul.f32 %v292, %v298
      %v308 = vld [vmem:[%s2] sm:$0x1]
      %v310 = vlaneseq
      %v311 = vshrl.u32 %v310, 7
      %v312 = vsub.s32 0, %v311
      %v313 = vrot.slane %v308, %v312
      %v315 = vadd.f32 %v300, %v313
      %v316 = vadd.f32 %v301, %v313
      %v317 = vadd.f32 %v302, %v313
      %v318 = vadd.f32 %v303, %v313
      %v319 = vadd.f32 %v304, %v313
      %v320 = vadd.f32 %v305, %v313
      %v321 = vadd.f32 %v306, %v313
      %v322 = vadd.f32 %v307, %v313
      %v323 = vld [vmem:[%s269] sm:$0xf]
      %v324 = vld [vmem:[%s269 + $0x4] sm:$0xf]
      %v325 = vld [vmem:[%s269 + $0x8] sm:$0xf]
      %v326 = vld [vmem:[%s269 + $0xc] sm:$0xf]
      %v327 = vld [vmem:[%s269 + $0x10] sm:$0xf]
      %v328 = vld [vmem:[%s269 + $0x14] sm:$0xf]
      %v329 = vld [vmem:[%s269 + $0x18] sm:$0xf]
      %v330 = vld [vmem:[%s269 + $0x1c] sm:$0xf]
      %v331 = vunpack.c.l.bf16 %v323
      %v332 = vunpack.c.l.bf16 %v324
      %v333 = vunpack.c.l.bf16 %v325
      %v334 = vunpack.c.l.bf16 %v326
      %v335 = vunpack.c.l.bf16 %v327
      %v336 = vunpack.c.l.bf16 %v328
      %v337 = vunpack.c.l.bf16 %v329
      %v338 = vunpack.c.l.bf16 %v330
      %v339 = vld [vmem:[%s4] sm:$0x1]
      %v341 = vlaneseq
      %v342 = vshrl.u32 %v341, 7
      %v343 = vsub.s32 0, %v342
      %v344 = vrot.slane %v339, %v343
      %v346 = vmul.f32 %v331, %v344
      %v347 = vmul.f32 %v332, %v344
      %v348 = vmul.f32 %v333, %v344
      %v349 = vmul.f32 %v334, %v344
      %v350 = vmul.f32 %v335, %v344
      %v351 = vmul.f32 %v336, %v344
      %v352 = vmul.f32 %v337, %v344
      %v353 = vmul.f32 %v338, %v344
      %v354 = vld [vmem:[%s5] sm:$0x1]
      %v356 = vlaneseq
      %v357 = vshrl.u32 %v356, 7
      %v358 = vsub.s32 0, %v357
      %v359 = vrot.slane %v354, %v358
      %v361 = vadd.f32 %v346, %v359
      %v362 = vadd.f32 %v347, %v359
      %v363 = vadd.f32 %v348, %v359
      %v364 = vadd.f32 %v349, %v359
      %v365 = vadd.f32 %v350, %v359
      %v366 = vadd.f32 %v351, %v359
      %v367 = vadd.f32 %v352, %v359
      %v368 = vadd.f32 %v353, %v359
      %v369 = vadd.f32 %v315, %v361
      %v370 = vadd.f32 %v316, %v362
      %v371 = vadd.f32 %v317, %v363
      %v372 = vadd.f32 %v318, %v364
      %v373 = vadd.f32 %v319, %v365
      %v374 = vadd.f32 %v320, %v366
      %v375 = vadd.f32 %v321, %v367
      %v376 = vadd.f32 %v322, %v368
      %v377 = vmax.f32 %v369, 0.0
      %v378 = vmax.f32 %v370, 0.0
      %v379 = vmax.f32 %v371, 0.0
      %v380 = vmax.f32 %v372, 0.0
      %v381 = vmax.f32 %v373, 0.0
      %v382 = vmax.f32 %v374, 0.0
      %v383 = vmax.f32 %v375, 0.0
      %v384 = vmax.f32 %v376, 0.0
      %385 = vst [vmem:[%s275] sm:$0xff] %v377
      %386 = vst [vmem:[%s275 + $0x8] sm:$0xff] %v378
      %387 = vst [vmem:[%s275 + $0x10] sm:$0xff] %v379
      %388 = vst [vmem:[%s275 + $0x18] sm:$0xff] %v380
      %389 = vst [vmem:[%s275 + $0x20] sm:$0xff] %v381
      %390 = vst [vmem:[%s275 + $0x28] sm:$0xff] %v382
      %391 = vst [vmem:[%s275 + $0x30] sm:$0xff] %v383
      %392 = vst [vmem:[%s275 + $0x38] sm:$0xff] %v384
      %s393 = smul.u32 8, %s17
      %p394 = scmp.lt.s32.totalorder %s393, 15
      %s395 = scalar_select %p394, %s393, 15
      %s396 = smul.addr %s395, 8
      %s397 = scalar_lea.vmem %s6, %s396
      // Predicated region
      $region45: #{basic_block_super_forward.7} parent=43 // pred_check
        %p398 = pneg %p171
      $region46: #{basic_block_super_forward.7} parent=43 // pred_check_branch
        %400 = sbr.rel (%p398) target = $region48
      $region47: #{basic_block_super_forward.7} parent=43 // pred_region
        %s401 = smul.u32 8, %s17
      $region48: #{basic_block_super_forward.7} parent=43 // pred_fallthru
        _
    $region44: #{basic_block_super_forward.7} parent=5 // pred_fallthru
      _
    %p402 = scmp.le.s32.totalorder 2, %s12
    // Predicated region
    $region49: #{basic_block_super_forward.7} parent=5 // pred_check
      %p403 = pneg %p402
    $region50: #{basic_block_super_forward.7} parent=5 // pred_check_branch
      %405 = sbr.rel (%p403) target = $region52
    $region51: #{basic_block_super_forward.7} parent=5 // pred_region
      %s406 = ssub.s32 %s12, 2
      // Predicated region
      $region53: #{basic_block_super_forward.7} parent=51 // pred_check
        %p407 = pneg %p177
      $region54: #{basic_block_super_forward.7} parent=51 // pred_check_branch
        %409 = sbr.rel (%p407) target = $region56
      $region55: #{basic_block_super_forward.7} parent=51 // pred_region
        %s410 = smul.u32 8, %s18
        %p411 = scmp.lt.s32.totalorder %s410, 15
        %s412 = scalar_select %p411, %s410, 15
        %s413 = smul.addr %s412, 8
        %s414 = scalar_lea.vmem %s6, %s413
      $region56: #{basic_block_super_forward.7} parent=51 // pred_fallthru
        _
    $region52: #{basic_block_super_forward.7} parent=5 // pred_fallthru
      _
  $region6: #{basic_block_super_forward.7} parent=0 // loop_footer
    %s16 = sadd.s32 1, %s12
  $region7: #{basic_block_super_forward.7} parent=0 // loop_footer_branch
    %11 = sbr.rel target = $region3
  $region8: #{basic_block_super_forward.7} parent=0 // loop_exit
    _

</llo_original>
